<compile_context>
chip_gen: v6e
topology: v6e:2x2x1
jax: 0.10.0
libtpu: 0.0.40
codegen_flags: <defaults>
</compile_context>

<pallas_src>
import functools

import numpy as np
import jax
import jax.numpy as jnp
from jax import lax
from jax.experimental import pallas as pl
from jax.experimental.pallas import tpu as pltpu


def _round_up(x, m):
    return ((x + m - 1) // m) * m


def _cdiv(a, b):
    return (a + b - 1) // b


# ----------------------------------------------------------------------------
# Pallas kernels
# ----------------------------------------------------------------------------
def _esn_train_kernel(u_ref, y_ref, winp_ref, wtp_ref, biascol_ref,
                      h_ref, xtx_ref, xty_ref, state_ref,
                      *, t_real, tc, bp, unroll, mask_time):
    """One time-chunk of the ESN recurrence + fused ridge accumulants.

    u_ref:      (tc*bp, Din+1)  time-major input rows, last col = masked ones
    y_ref:      (tc*bp, Dout)   time-major targets (no lane padding)
    winp_ref:   (Din+1, Xp)     padded [W_in ; w_bias]^T (lane 0 / lanes>H zero)
    wtp_ref:    (Xp, Xp)        padded W^T (row/col 0 and rows/cols > H zero)
    biascol_ref:(bp, Xp)        1.0 in lane 0 for real batch rows, else 0
    h_ref:      (tc*bp, Xp)     hidden states with bias lane (output block)
    xtx_ref:    (Xp, Xp)        resident accumulator (same block every chunk)
    xty_ref:    (Xp, Dout)      resident accumulator
    state_ref:  (bp, Xp)        persistent recurrent state scratch
    """
    c = pl.program_id(0)

    @pl.when(c == 0)
    def _init():
        state_ref[...] = jnp.zeros_like(state_ref)
        xtx_ref[...] = jnp.zeros_like(xtx_ref)
        xty_ref[...] = jnp.zeros_like(xty_ref)

    # --- chunk prologue: input projection (w_bias folded in) ----------------
    # One MXU matmul covering every timestep of the chunk; staged in the
    # hidden output block itself (row slab t is read then overwritten below).
    h_ref[...] = jnp.dot(u_ref[...], winp_ref[...],
                         preferred_element_type=jnp.float32)

    wtp = wtp_ref[...]
    bias_col = biascol_ref[...]

    def step(t, x):
        idx = pl.multiple_of(t * bp, bp)
        pre = h_ref[pl.ds(idx, bp), :] + jnp.dot(
            x, wtp, preferred_element_type=jnp.float32)
        x_new = jnp.tanh(pre)
        # bias lane added only on the store path (off the recurrent dep chain)
        h_ref[pl.ds(idx, bp), :] = x_new + bias_col
        return x_new

    state_ref[...] = lax.fori_loop(0, tc, step, state_ref[...], unroll=unroll)

    # --- zero padded-time rows once, on the last chunk only -----------------
    if mask_time:
        @pl.when(c == pl.num_programs(0) - 1)
        def _zero_tail():
            row_ids = lax.broadcasted_iota(jnp.int32, h_ref.shape, 0)
            n_valid_rows = (t_real - c * tc) * bp
            h_ref[...] = h_ref[...] * (row_ids < n_valid_rows).astype(jnp.float32)

    # --- fused ridge accumulants (hidden chunk still resident in VMEM) ------
    hc = h_ref[...]
    xtx_ref[...] += lax.dot_general(hc, hc, (((0,), (0,)), ((), ())),
                                    preferred_element_type=jnp.float32)
    xty_ref[...] += lax.dot_general(hc, y_ref[...], (((0,), (0,)), ((), ())),
                                    preferred_element_type=jnp.float32)


def _esn_eval_kernel(u_ref, winp_ref, wtp_ref, wouth_ref,
                     o_ref, state_ref, hbuf_ref,
                     *, tc, bp, unroll):
    """One time-chunk of the ESN recurrence with the readout fused in.

    Hidden states stay in the VMEM scratch `hbuf_ref` — they never hit HBM.
    The w_out bias row is added on the (tiny) output in the wrapper.
    """
    c = pl.program_id(0)

    @pl.when(c == 0)
    def _init():
        state_ref[...] = jnp.zeros_like(state_ref)

    hbuf_ref[...] = jnp.dot(u_ref[...], winp_ref[...],
                            preferred_element_type=jnp.float32)

    wtp = wtp_ref[...]

    def step(t, x):
        idx = pl.multiple_of(t * bp, bp)
        pre = hbuf_ref[pl.ds(idx, bp), :] + jnp.dot(
            x, wtp, preferred_element_type=jnp.float32)
        x_new = jnp.tanh(pre)
        hbuf_ref[pl.ds(idx, bp), :] = x_new
        return x_new

    state_ref[...] = lax.fori_loop(0, tc, step, state_ref[...], unroll=unroll)

    # fused readout: (tc*bp, Xp) @ (Xp, Dout)   (bias lane of hbuf is zero,
    # the w_out bias row is re-added in the wrapper on the sliced output)
    o_ref[...] = jnp.dot(hbuf_ref[...], wouth_ref[...],
                         preferred_element_type=jnp.float32)


# ----------------------------------------------------------------------------
# VMEM-aware sizing
# ----------------------------------------------------------------------------
def _vmem_limit_bytes():
    """Generation-aware scoped-VMEM limit (v5e/v6e: 128 MiB, v7x: 64 MiB)."""
    cap = None
    try:
        cap = getattr(pltpu.get_tpu_info(), "vmem_capacity_bytes", None)
    except Exception:
        cap = None
    if not cap:
        cap = 64 << 20          # conservative fallback = v7x per-core VMEM
    return int(cap * 0.70)


def _pick_time_chunk(t_len, per_t_bytes, resident_bytes, limit_bytes):
    """Pick a time chunk so (resident + Tc-scaled working set) fits the budget."""
    budget = int(0.65 * max(limit_bytes - resident_bytes, 1 << 20))
    tc = max(8, budget // max(per_t_bytes, 1))
    tc = min(tc, 1024, max(t_len, 1))
    if tc < t_len:
        tc = max(8, (tc // 8) * 8)
    return max(tc, 1)


# ----------------------------------------------------------------------------
# Wrapper
# ----------------------------------------------------------------------------
def esn_forward(u, params, y=None, training=True, time_chunk=None):
    """ESN.forward (learning_algo='inv', with_bias=True, no feedbacks).

    training=True : returns (hidden_states_with_bias (B,T,H+1), new_xTx, new_xTy)
    training=False: returns outputs (B, T, output_dim)
    """
    f32 = jnp.float32
    w_in, w, w_bias = params["w_in"], params["w"], params["w_bias"]
    B, T, Din = u.shape
    H = w.shape[0]
    X = H + 1                                   # bias column + hidden
    Xp = _round_up(X, 128)                      # lane-dense padded state width
    Bp = _round_up(B, 8)                        # sublane-aligned batch
    Dinb = Din + 1                              # + folded bias ("ones") column

    # Padded weights; lane 0 of the padded state is reserved for the constant
    # bias column, w_bias rides as an extra row of the input projection.
    winp = (jnp.zeros((Dinb, Xp), f32)
            .at[:Din, 1:X].set(w_in.T.astype(f32))
            .at[Din, 1:X].set(w_bias.astype(f32)))
    wtp = jnp.zeros((Xp, Xp), f32).at[1:X, 1:X].set(w.T.astype(f32))
    bmask = (jnp.arange(Bp) < B).astype(f32)[:, None]               # (Bp, 1)
    biascol = jnp.zeros((Xp,), f32).at[0].set(1.0)[None, :] * bmask  # (Bp, Xp)

    Dout = y.shape[-1] if training else params["w_out"].shape[1]

    limit = _vmem_limit_bytes()
    if training:
        per_t = 4 * Bp * (2 * Dinb + 2 * Dout + 2 * Xp)     # dbl-buffered u/y/h
        resident = 4 * (2 * Dinb * Xp + 2 * Xp * Xp + 2 * Bp * Xp
                        + 2 * Xp * Xp + 2 * Xp * Dout + Bp * Xp)
    else:
        per_t = 4 * Bp * (2 * Dinb + 2 * Dout + Xp)         # u/o blocks + hbuf
        resident = 4 * (2 * Dinb * Xp + 2 * Xp * Xp + 2 * Xp * Dout + Bp * Xp)

    if time_chunk is not None:
        Tc = int(max(1, min(int(time_chunk), T)))
    else:
        Tc = _pick_time_chunk(T, per_t, resident, limit)

    n_chunks = _cdiv(T, Tc)
    Tp = n_chunks * Tc
    rows = Tc * Bp
    unroll = True if Tc <= 16 else (8 if Tc % 8 == 0 else 1)
    mask_time = (Tp != T)

    # Time-major, batch/time zero-padded input rows with the masked ones column
    # appended (u is tiny — Din << H — so this transpose/concat is cheap).
    u_tm = jnp.transpose(u.astype(f32), (1, 0, 2))                  # (T, B, Din)
    u_pad = jnp.pad(u_tm, ((0, Tp - T), (0, Bp - B), (0, 0)))       # (Tp, Bp, Din)
    ones_col = jnp.broadcast_to(bmask[None, :, :], (Tp, Bp, 1))
    u2 = jnp.concatenate([u_pad, ones_col], axis=-1).reshape(Tp * Bp, Dinb)

    cparams = pltpu.CompilerParams(
        dimension_semantics=("arbitrary",),          # serial recurrence over time
        vmem_limit_bytes=limit,
    )

    if training:
        y_tm = jnp.transpose(y.astype(f32), (1, 0, 2))
        y2 = jnp.pad(y_tm, ((0, Tp - T), (0, Bp - B),
                            (0, 0))).reshape(Tp * Bp, Dout)

        kernel = functools.partial(_esn_train_kernel, t_real=T, tc=Tc, bp=Bp,
                                   unroll=unroll, mask_time=mask_time)
        h2, xtx_p, xty_p = pl.pallas_call(
            kernel,
            out_shape=(jax.ShapeDtypeStruct((Tp * Bp, Xp), f32),
                       jax.ShapeDtypeStruct((Xp, Xp), f32),
                       jax.ShapeDtypeStruct((Xp, Dout), f32)),
            grid_spec=pltpu.PrefetchScalarGridSpec(
                num_scalar_prefetch=0,
                grid=(n_chunks,),
                in_specs=[
                    pl.BlockSpec((rows, Dinb), lambda c: (c, 0)),
                    pl.BlockSpec((rows, Dout), lambda c: (c, 0)),
                    pl.BlockSpec((Dinb, Xp), lambda c: (0, 0)),
                    pl.BlockSpec((Xp, Xp), lambda c: (0, 0)),
                    pl.BlockSpec((Bp, Xp), lambda c: (0, 0)),
                ],
                out_specs=(
                    pl.BlockSpec((rows, Xp), lambda c: (c, 0)),
                    pl.BlockSpec((Xp, Xp), lambda c: (0, 0)),
                    pl.BlockSpec((Xp, Dout), lambda c: (0, 0)),
                ),
                scratch_shapes=[pltpu.VMEM((Bp, Xp), f32)],
            ),
            compiler_params=cparams,
        )(u2, y2, winp, wtp, biascol)

        # The module returns the hidden states batch-major; this transpose only
        # touches the (already sliced) returned tensor.
        hidden_b = jnp.transpose(h2.reshape(Tp, Bp, Xp)[:T, :B, :X], (1, 0, 2))
        new_xtx = params["xTx"] + xtx_p[:X, :X]
        new_xty = params["xTy"] + xty_p[:X, :]
        return hidden_b, new_xtx, new_xty

    else:
        w_out = params["w_out"].astype(f32)                         # (H+1, Dout)
        wouth = jnp.zeros((Xp, Dout), f32).at[1:X, :].set(w_out[1:X, :])

        kernel = functools.partial(_esn_eval_kernel, tc=Tc, bp=Bp, unroll=unroll)
        o2 = pl.pallas_call(
            kernel,
            out_shape=jax.ShapeDtypeStruct((Tp * Bp, Dout), f32),
            grid_spec=pltpu.PrefetchScalarGridSpec(
                num_scalar_prefetch=0,
                grid=(n_chunks,),
                in_specs=[
                    pl.BlockSpec((rows, Dinb), lambda c: (c, 0)),
                    pl.BlockSpec((Dinb, Xp), lambda c: (0, 0)),
                    pl.BlockSpec((Xp, Xp), lambda c: (0, 0)),
                    pl.BlockSpec((Xp, Dout), lambda c: (0, 0)),
                ],
                out_specs=pl.BlockSpec((rows, Dout), lambda c: (c, 0)),
                scratch_shapes=[pltpu.VMEM((Bp, Xp), f32),
                                pltpu.VMEM((rows, Xp), f32)],
            ),
            compiler_params=cparams,
        )(u2, winp, wtp, wouth)

        outputs = jnp.transpose(o2.reshape(Tp, Bp, Dout)[:T, :B, :], (1, 0, 2))
        # readout bias row (constant-1 feature) added on the tiny sliced output
        outputs = outputs + w_out[0][None, None, :]
        return outputs


# ----------------------------------------------------------------------------
# Pure-JAX reference (for correctness checking)
# ----------------------------------------------------------------------------
def _esn_reference(u, params, y=None, training=True):
    w_in, w, w_bias = params["w_in"], params["w"], params["w_bias"]
    B, T, _ = u.shape
    H = w.shape[0]

    def step(x, ut):                                   # x: (B,H), ut: (B,Din)
        x_new = jnp.tanh(ut @ w_in.T + x @ w.T + w_bias)
        return x_new, x_new

    _, h_tm = lax.scan(step, jnp.zeros((B, H), jnp.float32),
                       jnp.transpose(u, (1, 0, 2)))
    hidden = jnp.transpose(h_tm, (1, 0, 2))            # (B, T, H)
    hidden_b = jnp.concatenate([jnp.ones((B, T, 1), jnp.float32), hidden], axis=2)
    hf = hidden_b.reshape(B * T, H + 1)
    if training:
        yf = y.reshape(B * T, -1)
        return hidden_b, params["xTx"] + hf.T @ hf, params["xTy"] + hf.T @ yf
    return (hf @ params["w_out"]).reshape(B, T, -1)


# ----------------------------------------------------------------------------
# Deterministic parameter init (mirrors ESNCell.__init__ shapes/scalings)
# ----------------------------------------------------------------------------
def init_esn_params(key, input_dim, hidden_dim, output_dim,
                    spectral_radius=0.9, bias_scaling=0.0, input_scaling=1.0):
    k_w, k_win, k_wb, k_wout = jax.random.split(key, 4)

    # W: uniform(-1, 1), rescaled to the target spectral radius (host-side eig).
    w_np = np.asarray(jax.random.uniform(k_w, (hidden_dim, hidden_dim),
                                         minval=-1.0, maxval=1.0), dtype=np.float64)
    rho = np.max(np.abs(np.linalg.eigvals(w_np)))
    w = jnp.asarray(w_np * (spectral_radius / rho), dtype=jnp.float32)

    # W_in: random choice from input_set {1, -1} scaled by input_scaling.
    signs = jnp.where(jax.random.bernoulli(k_win, 0.5, (hidden_dim, input_dim)),
                      1.0, -1.0).astype(jnp.float32)
    w_in = signs * input_scaling

    # w_bias: uniform(-1, 1) * bias_scaling.
    w_bias = (jax.random.uniform(k_wb, (hidden_dim,), minval=-1.0, maxval=1.0)
              * bias_scaling).astype(jnp.float32)

    x_size = hidden_dim + 1
    params = {
        "w": w,
        "w_in": w_in,
        "w_bias": w_bias,
        "xTx": jnp.zeros((x_size, x_size), jnp.float32),
        "xTy": jnp.zeros((x_size, output_dim), jnp.float32),
        # synthetic trained readout (finalize() not run here)
        "w_out": (0.1 * jax.random.normal(k_wout, (x_size, output_dim))
                  ).astype(jnp.float32),
    }
    return params


# ----------------------------------------------------------------------------
# Demo
# ----------------------------------------------------------------------------
if __name__ == "__main__":
    input_dim, hidden_dim, output_dim = 4, 32, 3

    key = jax.random.PRNGKey(0)
    k_params, k_u1, k_y1, k_u2, k_y2 = jax.random.split(key, 5)

    # bias_scaling != 0 so the folded w_bias path is exercised numerically.
    params = init_esn_params(k_params, input_dim, hidden_dim, output_dim,
                             spectral_radius=0.9, bias_scaling=0.5,
                             input_scaling=1.0)

    # ---- Case 1: single time chunk -----------------------------------------
    B1, T1 = 2, 8
    u1 = jax.random.normal(k_u1, (B1, T1, input_dim), dtype=jnp.float32)
    y1 = jax.random.normal(k_y1, (B1, T1, output_dim), dtype=jnp.float32)

    hidden_b, xtx, xty = esn_forward(u1, params, y=y1, training=True)
    outputs = esn_forward(u1, params, training=False)
    jax.block_until_ready((hidden_b, xtx, xty, outputs))
    assert hidden_b.shape == (B1, T1, hidden_dim + 1)
    assert xtx.shape == (hidden_dim + 1, hidden_dim + 1)
    assert xty.shape == (hidden_dim + 1, output_dim)
    assert outputs.shape == (B1, T1, output_dim)

    ref_h, ref_xtx, ref_xty = _esn_reference(u1, params, y=y1, training=True)
    ref_o = _esn_reference(u1, params, training=False)
    np.testing.assert_allclose(np.asarray(hidden_b), np.asarray(ref_h),
                               atol=2e-3, rtol=2e-3)
    np.testing.assert_allclose(np.asarray(xtx), np.asarray(ref_xtx),
                               atol=2e-3, rtol=2e-3)
    np.testing.assert_allclose(np.asarray(xty), np.asarray(ref_xty),
                               atol=2e-3, rtol=2e-3)
    np.testing.assert_allclose(np.asarray(outputs), np.asarray(ref_o),
                               atol=2e-3, rtol=2e-3)

    # ---- Case 2: multi-chunk with a padded time tail ------------------------
    # (exercises the resident accumulators across chunks, the persistent
    #  recurrent state scratch and the last-chunk tail masking)
    B2, T2 = 2, 20
    u2_in = jax.random.normal(k_u2, (B2, T2, input_dim), dtype=jnp.float32)
    y2_in = jax.random.normal(k_y2, (B2, T2, output_dim), dtype=jnp.float32)

    hidden_b2, xtx2, xty2 = esn_forward(u2_in, params, y=y2_in, training=True,
                                        time_chunk=8)
    outputs2 = esn_forward(u2_in, params, training=False, time_chunk=8)
    jax.block_until_ready((hidden_b2, xtx2, xty2, outputs2))

    ref_h2, ref_xtx2, ref_xty2 = _esn_reference(u2_in, params, y=y2_in,
                                                training=True)
    ref_o2 = _esn_reference(u2_in, params, training=False)
    np.testing.assert_allclose(np.asarray(hidden_b2), np.asarray(ref_h2),
                               atol=2e-3, rtol=2e-3)
    np.testing.assert_allclose(np.asarray(xtx2), np.asarray(ref_xtx2),
                               atol=2e-3, rtol=2e-3)
    np.testing.assert_allclose(np.asarray(xty2), np.asarray(ref_xty2),
                               atol=2e-3, rtol=2e-3)
    np.testing.assert_allclose(np.asarray(outputs2), np.asarray(ref_o2),
                               atol=2e-3, rtol=2e-3)

    print("KERNEL_OK")
</pallas_src>

<mosaic_0001>
module attributes {stable_mosaic.version = 11 : i64} {
  func.func @_esn_train_kernel(%arg0: i32, %arg1: memref<64x5xf32, #tpu.memory_space<vmem>>, %arg2: memref<64x3xf32, #tpu.memory_space<vmem>>, %arg3: memref<5x128xf32, #tpu.memory_space<vmem>>, %arg4: memref<128x128xf32, #tpu.memory_space<vmem>>, %arg5: memref<8x128xf32, #tpu.memory_space<vmem>>, %arg6: memref<64x128xf32, #tpu.memory_space<vmem>>, %arg7: memref<128x128xf32, #tpu.memory_space<vmem>>, %arg8: memref<128x3xf32, #tpu.memory_space<vmem>>, %arg9: memref<8x128xf32, #tpu.memory_space<vmem>>) attributes {dimension_semantics = [#tpu.dimension_semantics<arbitrary>], iteration_bounds = array<i64: 1>, scalar_prefetch = 0 : i64, scratch_operands = 1 : i64, tpu.core_type = #tpu.core_type<tc>, window_params = [{transform_indices = @transform_0, window_bounds = array<i64: 64, 5>}, {transform_indices = @transform_1, window_bounds = array<i64: 64, 3>}, {pipeline_mode = #tpu.pipeline_mode<synchronous>, transform_indices = @transform_2, window_bounds = array<i64: 5, 128>}, {pipeline_mode = #tpu.pipeline_mode<synchronous>, transform_indices = @transform_3, window_bounds = array<i64: 128, 128>}, {pipeline_mode = #tpu.pipeline_mode<synchronous>, transform_indices = @transform_4, window_bounds = array<i64: 8, 128>}, {transform_indices = @transform_5, window_bounds = array<i64: 64, 128>}, {pipeline_mode = #tpu.pipeline_mode<synchronous>, transform_indices = @transform_6, window_bounds = array<i64: 128, 128>}, {pipeline_mode = #tpu.pipeline_mode<synchronous>, transform_indices = @transform_7, window_bounds = array<i64: 128, 3>}]} {
    %c0_i32 = arith.constant 0 : i32
    %0 = arith.cmpi eq, %arg0, %c0_i32 : i32
    %1 = arith.extui %0 : i1 to i32
    %c0_i32_0 = arith.constant 0 : i32
    %2 = arith.cmpi ne, %1, %c0_i32_0 : i32
    scf.if %2 {
      %cst_61 = arith.constant 0.000000e+00 : f32
      %101 = vector.broadcast %cst_61 : f32 to vector<8x128xf32>
      %c0_62 = arith.constant 0 : index
      %c0_63 = arith.constant 0 : index
      %102 = vector.load %arg9[%c0_62, %c0_63] : memref<8x128xf32, #tpu.memory_space<vmem>>, vector<8x128xf32>
      tpu.vector_store %arg9[%c0_62, %c0_63], %101 {strides = array<i32>} : memref<8x128xf32, #tpu.memory_space<vmem>>, vector<8x128xf32>,
      %cst_64 = arith.constant 0.000000e+00 : f32
      %103 = vector.broadcast %cst_64 : f32 to vector<128x128xf32>
      %c0_65 = arith.constant 0 : index
      %c0_66 = arith.constant 0 : index
      %104 = vector.load %arg7[%c0_65, %c0_66] : memref<128x128xf32, #tpu.memory_space<vmem>>, vector<128x128xf32>
      tpu.vector_store %arg7[%c0_65, %c0_66], %103 {strides = array<i32>} : memref<128x128xf32, #tpu.memory_space<vmem>>, vector<128x128xf32>,
      %cst_67 = arith.constant 0.000000e+00 : f32
      %105 = vector.broadcast %cst_67 : f32 to vector<128x3xf32>
      %c0_68 = arith.constant 0 : index
      %c0_69 = arith.constant 0 : index
      %106 = vector.load %arg8[%c0_68, %c0_69] : memref<128x3xf32, #tpu.memory_space<vmem>>, vector<128x3xf32>
      tpu.vector_store %arg8[%c0_68, %c0_69], %105 {strides = array<i32>} : memref<128x3xf32, #tpu.memory_space<vmem>>, vector<128x3xf32>,
    } else {
    }
    %c0 = arith.constant 0 : index
    %c0_1 = arith.constant 0 : index
    %3 = vector.load %arg1[%c0, %c0_1] : memref<64x5xf32, #tpu.memory_space<vmem>>, vector<64x5xf32>
    %c0_2 = arith.constant 0 : index
    %c0_3 = arith.constant 0 : index
    %4 = vector.load %arg3[%c0_2, %c0_3] : memref<5x128xf32, #tpu.memory_space<vmem>>, vector<5x128xf32>
    %cst = arith.constant dense<0.000000e+00> : vector<64x128xf32>
    %5 = tpu.matmul %3, %4, %cst {dimension_numbers = #tpu.dot_dimension_numbers<[1], [0], [0], [1], [0, 0, 1, 1], [], []>} : vector<64x5xf32>, vector<5x128xf32>, vector<64x128xf32> -> vector<64x128xf32>
    %c0_4 = arith.constant 0 : index
    %c0_5 = arith.constant 0 : index
    %6 = vector.load %arg6[%c0_4, %c0_5] : memref<64x128xf32, #tpu.memory_space<vmem>>, vector<64x128xf32>
    tpu.vector_store %arg6[%c0_4, %c0_5], %5 {strides = array<i32>} : memref<64x128xf32, #tpu.memory_space<vmem>>, vector<64x128xf32>,
    %c0_6 = arith.constant 0 : index
    %c0_7 = arith.constant 0 : index
    %7 = vector.load %arg4[%c0_6, %c0_7] : memref<128x128xf32, #tpu.memory_space<vmem>>, vector<128x128xf32>
    %c0_8 = arith.constant 0 : index
    %c0_9 = arith.constant 0 : index
    %8 = vector.load %arg5[%c0_8, %c0_9] : memref<8x128xf32, #tpu.memory_space<vmem>>, vector<8x128xf32>
    %c0_10 = arith.constant 0 : index
    %c0_11 = arith.constant 0 : index
    %9 = vector.load %arg9[%c0_10, %c0_11] : memref<8x128xf32, #tpu.memory_space<vmem>>, vector<8x128xf32>
    %c0_i32_12 = arith.constant 0 : i32
    %c8_i32 = arith.constant 8 : i32
    %10 = arith.muli %c0_i32_12, %c8_i32 : i32
    %11 = tpu.assume_multiple %10, 8 : i32
    %12 = arith.index_cast %11 : i32 to index
    %c0_13 = arith.constant 0 : index
    %13 = vector.load %arg6[%12, %c0_13] : memref<64x128xf32, #tpu.memory_space<vmem>>, vector<8x128xf32>
    %cst_14 = arith.constant dense<0.000000e+00> : vector<8x128xf32>
    %14 = tpu.matmul %9, %7, %cst_14 {dimension_numbers = #tpu.dot_dimension_numbers<[1], [0], [0], [1], [0, 0, 1, 1], [], []>} : vector<8x128xf32>, vector<128x128xf32>, vector<8x128xf32> -> vector<8x128xf32>
    %15 = arith.addf %13, %14 : vector<8x128xf32>
    %16 = math.tanh %15 : vector<8x128xf32>
    %17 = arith.addf %16, %8 : vector<8x128xf32>
    %18 = arith.index_cast %11 : i32 to index
    %c0_15 = arith.constant 0 : index
    %19 = vector.load %arg6[%18, %c0_15] : memref<64x128xf32, #tpu.memory_space<vmem>>, vector<8x128xf32>
    tpu.vector_store %arg6[%18, %c0_15], %17 {strides = array<i32>} : memref<64x128xf32, #tpu.memory_space<vmem>>, vector<8x128xf32>,
    %c1_i32 = arith.constant 1 : i32
    %c8_i32_16 = arith.constant 8 : i32
    %20 = arith.muli %c1_i32, %c8_i32_16 : i32
    %21 = tpu.assume_multiple %20, 8 : i32
    %22 = arith.index_cast %21 : i32 to index
    %c0_17 = arith.constant 0 : index
    %23 = vector.load %arg6[%22, %c0_17] : memref<64x128xf32, #tpu.memory_space<vmem>>, vector<8x128xf32>
    %cst_18 = arith.constant dense<0.000000e+00> : vector<8x128xf32>
    %24 = tpu.matmul %16, %7, %cst_18 {dimension_numbers = #tpu.dot_dimension_numbers<[1], [0], [0], [1], [0, 0, 1, 1], [], []>} : vector<8x128xf32>, vector<128x128xf32>, vector<8x128xf32> -> vector<8x128xf32>
    %25 = arith.addf %23, %24 : vector<8x128xf32>
    %26 = math.tanh %25 : vector<8x128xf32>
    %27 = arith.addf %26, %8 : vector<8x128xf32>
    %28 = arith.index_cast %21 : i32 to index
    %c0_19 = arith.constant 0 : index
    %29 = vector.load %arg6[%28, %c0_19] : memref<64x128xf32, #tpu.memory_space<vmem>>, vector<8x128xf32>
    tpu.vector_store %arg6[%28, %c0_19], %27 {strides = array<i32>} : memref<64x128xf32, #tpu.memory_space<vmem>>, vector<8x128xf32>,
    %c2_i32 = arith.constant 2 : i32
    %c8_i32_20 = arith.constant 8 : i32
    %30 = arith.muli %c2_i32, %c8_i32_20 : i32
    %31 = tpu.assume_multiple %30, 8 : i32
    %32 = arith.index_cast %31 : i32 to index
    %c0_21 = arith.constant 0 : index
    %33 = vector.load %arg6[%32, %c0_21] : memref<64x128xf32, #tpu.memory_space<vmem>>, vector<8x128xf32>
    %cst_22 = arith.constant dense<0.000000e+00> : vector<8x128xf32>
    %34 = tpu.matmul %26, %7, %cst_22 {dimension_numbers = #tpu.dot_dimension_numbers<[1], [0], [0], [1], [0, 0, 1, 1], [], []>} : vector<8x128xf32>, vector<128x128xf32>, vector<8x128xf32> -> vector<8x128xf32>
    %35 = arith.addf %33, %34 : vector<8x128xf32>
    %36 = math.tanh %35 : vector<8x128xf32>
    %37 = arith.addf %36, %8 : vector<8x128xf32>
    %38 = arith.index_cast %31 : i32 to index
    %c0_23 = arith.constant 0 : index
    %39 = vector.load %arg6[%38, %c0_23] : memref<64x128xf32, #tpu.memory_space<vmem>>, vector<8x128xf32>
    tpu.vector_store %arg6[%38, %c0_23], %37 {strides = array<i32>} : memref<64x128xf32, #tpu.memory_space<vmem>>, vector<8x128xf32>,
    %c3_i32 = arith.constant 3 : i32
    %c8_i32_24 = arith.constant 8 : i32
    %40 = arith.muli %c3_i32, %c8_i32_24 : i32
    %41 = tpu.assume_multiple %40, 8 : i32
    %42 = arith.index_cast %41 : i32 to index
    %c0_25 = arith.constant 0 : index
    %43 = vector.load %arg6[%42, %c0_25] : memref<64x128xf32, #tpu.memory_space<vmem>>, vector<8x128xf32>
    %cst_26 = arith.constant dense<0.000000e+00> : vector<8x128xf32>
    %44 = tpu.matmul %36, %7, %cst_26 {dimension_numbers = #tpu.dot_dimension_numbers<[1], [0], [0], [1], [0, 0, 1, 1], [], []>} : vector<8x128xf32>, vector<128x128xf32>, vector<8x128xf32> -> vector<8x128xf32>
    %45 = arith.addf %43, %44 : vector<8x128xf32>
    %46 = math.tanh %45 : vector<8x128xf32>
    %47 = arith.addf %46, %8 : vector<8x128xf32>
    %48 = arith.index_cast %41 : i32 to index
    %c0_27 = arith.constant 0 : index
    %49 = vector.load %arg6[%48, %c0_27] : memref<64x128xf32, #tpu.memory_space<vmem>>, vector<8x128xf32>
    tpu.vector_store %arg6[%48, %c0_27], %47 {strides = array<i32>} : memref<64x128xf32, #tpu.memory_space<vmem>>, vector<8x128xf32>,
    %c4_i32 = arith.constant 4 : i32
    %c8_i32_28 = arith.constant 8 : i32
    %50 = arith.muli %c4_i32, %c8_i32_28 : i32
    %51 = tpu.assume_multiple %50, 8 : i32
    %52 = arith.index_cast %51 : i32 to index
    %c0_29 = arith.constant 0 : index
    %53 = vector.load %arg6[%52, %c0_29] : memref<64x128xf32, #tpu.memory_space<vmem>>, vector<8x128xf32>
    %cst_30 = arith.constant dense<0.000000e+00> : vector<8x128xf32>
    %54 = tpu.matmul %46, %7, %cst_30 {dimension_numbers = #tpu.dot_dimension_numbers<[1], [0], [0], [1], [0, 0, 1, 1], [], []>} : vector<8x128xf32>, vector<128x128xf32>, vector<8x128xf32> -> vector<8x128xf32>
    %55 = arith.addf %53, %54 : vector<8x128xf32>
    %56 = math.tanh %55 : vector<8x128xf32>
    %57 = arith.addf %56, %8 : vector<8x128xf32>
    %58 = arith.index_cast %51 : i32 to index
    %c0_31 = arith.constant 0 : index
    %59 = vector.load %arg6[%58, %c0_31] : memref<64x128xf32, #tpu.memory_space<vmem>>, vector<8x128xf32>
    tpu.vector_store %arg6[%58, %c0_31], %57 {strides = array<i32>} : memref<64x128xf32, #tpu.memory_space<vmem>>, vector<8x128xf32>,
    %c5_i32 = arith.constant 5 : i32
    %c8_i32_32 = arith.constant 8 : i32
    %60 = arith.muli %c5_i32, %c8_i32_32 : i32
    %61 = tpu.assume_multiple %60, 8 : i32
    %62 = arith.index_cast %61 : i32 to index
    %c0_33 = arith.constant 0 : index
    %63 = vector.load %arg6[%62, %c0_33] : memref<64x128xf32, #tpu.memory_space<vmem>>, vector<8x128xf32>
    %cst_34 = arith.constant dense<0.000000e+00> : vector<8x128xf32>
    %64 = tpu.matmul %56, %7, %cst_34 {dimension_numbers = #tpu.dot_dimension_numbers<[1], [0], [0], [1], [0, 0, 1, 1], [], []>} : vector<8x128xf32>, vector<128x128xf32>, vector<8x128xf32> -> vector<8x128xf32>
    %65 = arith.addf %63, %64 : vector<8x128xf32>
    %66 = math.tanh %65 : vector<8x128xf32>
    %67 = arith.addf %66, %8 : vector<8x128xf32>
    %68 = arith.index_cast %61 : i32 to index
    %c0_35 = arith.constant 0 : index
    %69 = vector.load %arg6[%68, %c0_35] : memref<64x128xf32, #tpu.memory_space<vmem>>, vector<8x128xf32>
    tpu.vector_store %arg6[%68, %c0_35], %67 {strides = array<i32>} : memref<64x128xf32, #tpu.memory_space<vmem>>, vector<8x128xf32>,
    %c6_i32 = arith.constant 6 : i32
    %c8_i32_36 = arith.constant 8 : i32
    %70 = arith.muli %c6_i32, %c8_i32_36 : i32
    %71 = tpu.assume_multiple %70, 8 : i32
    %72 = arith.index_cast %71 : i32 to index
    %c0_37 = arith.constant 0 : index
    %73 = vector.load %arg6[%72, %c0_37] : memref<64x128xf32, #tpu.memory_space<vmem>>, vector<8x128xf32>
    %cst_38 = arith.constant dense<0.000000e+00> : vector<8x128xf32>
    %74 = tpu.matmul %66, %7, %cst_38 {dimension_numbers = #tpu.dot_dimension_numbers<[1], [0], [0], [1], [0, 0, 1, 1], [], []>} : vector<8x128xf32>, vector<128x128xf32>, vector<8x128xf32> -> vector<8x128xf32>
    %75 = arith.addf %73, %74 : vector<8x128xf32>
    %76 = math.tanh %75 : vector<8x128xf32>
    %77 = arith.addf %76, %8 : vector<8x128xf32>
    %78 = arith.index_cast %71 : i32 to index
    %c0_39 = arith.constant 0 : index
    %79 = vector.load %arg6[%78, %c0_39] : memref<64x128xf32, #tpu.memory_space<vmem>>, vector<8x128xf32>
    tpu.vector_store %arg6[%78, %c0_39], %77 {strides = array<i32>} : memref<64x128xf32, #tpu.memory_space<vmem>>, vector<8x128xf32>,
    %c7_i32 = arith.constant 7 : i32
    %c8_i32_40 = arith.constant 8 : i32
    %80 = arith.muli %c7_i32, %c8_i32_40 : i32
    %81 = tpu.assume_multiple %80, 8 : i32
    %82 = arith.index_cast %81 : i32 to index
    %c0_41 = arith.constant 0 : index
    %83 = vector.load %arg6[%82, %c0_41] : memref<64x128xf32, #tpu.memory_space<vmem>>, vector<8x128xf32>
    %cst_42 = arith.constant dense<0.000000e+00> : vector<8x128xf32>
    %84 = tpu.matmul %76, %7, %cst_42 {dimension_numbers = #tpu.dot_dimension_numbers<[1], [0], [0], [1], [0, 0, 1, 1], [], []>} : vector<8x128xf32>, vector<128x128xf32>, vector<8x128xf32> -> vector<8x128xf32>
    %85 = arith.addf %83, %84 : vector<8x128xf32>
    %86 = math.tanh %85 : vector<8x128xf32>
    %87 = arith.addf %86, %8 : vector<8x128xf32>
    %88 = arith.index_cast %81 : i32 to index
    %c0_43 = arith.constant 0 : index
    %89 = vector.load %arg6[%88, %c0_43] : memref<64x128xf32, #tpu.memory_space<vmem>>, vector<8x128xf32>
    tpu.vector_store %arg6[%88, %c0_43], %87 {strides = array<i32>} : memref<64x128xf32, #tpu.memory_space<vmem>>, vector<8x128xf32>,
    %c8_i32_44 = arith.constant 8 : i32
    %c0_45 = arith.constant 0 : index
    %c0_46 = arith.constant 0 : index
    %90 = vector.load %arg9[%c0_45, %c0_46] : memref<8x128xf32, #tpu.memory_space<vmem>>, vector<8x128xf32>
    tpu.vector_store %arg9[%c0_45, %c0_46], %86 {strides = array<i32>} : memref<8x128xf32, #tpu.memory_space<vmem>>, vector<8x128xf32>,
    %c0_47 = arith.constant 0 : index
    %c0_48 = arith.constant 0 : index
    %91 = vector.load %arg6[%c0_47, %c0_48] : memref<64x128xf32, #tpu.memory_space<vmem>>, vector<64x128xf32>
    %c0_49 = arith.constant 0 : index
    %c0_50 = arith.constant 0 : index
    %92 = vector.load %arg7[%c0_49, %c0_50] : memref<128x128xf32, #tpu.memory_space<vmem>>, vector<128x128xf32>
    %cst_51 = arith.constant dense<0.000000e+00> : vector<128x128xf32>
    %93 = tpu.matmul %91, %91, %cst_51 {dimension_numbers = #tpu.dot_dimension_numbers<[0], [0], [1], [1], [0, 1, 1, 1], [], []>} : vector<64x128xf32>, vector<64x128xf32>, vector<128x128xf32> -> vector<128x128xf32>
    %94 = arith.addf %92, %93 : vector<128x128xf32>
    %c0_52 = arith.constant 0 : index
    %c0_53 = arith.constant 0 : index
    %95 = vector.load %arg7[%c0_52, %c0_53] : memref<128x128xf32, #tpu.memory_space<vmem>>, vector<128x128xf32>
    tpu.vector_store %arg7[%c0_52, %c0_53], %94 {strides = array<i32>} : memref<128x128xf32, #tpu.memory_space<vmem>>, vector<128x128xf32>,
    %c0_54 = arith.constant 0 : index
    %c0_55 = arith.constant 0 : index
    %96 = vector.load %arg8[%c0_54, %c0_55] : memref<128x3xf32, #tpu.memory_space<vmem>>, vector<128x3xf32>
    %c0_56 = arith.constant 0 : index
    %c0_57 = arith.constant 0 : index
    %97 = vector.load %arg2[%c0_56, %c0_57] : memref<64x3xf32, #tpu.memory_space<vmem>>, vector<64x3xf32>
    %cst_58 = arith.constant dense<0.000000e+00> : vector<128x3xf32>
    %98 = tpu.matmul %91, %97, %cst_58 {dimension_numbers = #tpu.dot_dimension_numbers<[0], [0], [1], [1], [0, 1, 1, 1], [], []>} : vector<64x128xf32>, vector<64x3xf32>, vector<128x3xf32> -> vector<128x3xf32>
    %99 = arith.addf %96, %98 : vector<128x3xf32>
    %c0_59 = arith.constant 0 : index
    %c0_60 = arith.constant 0 : index
    %100 = vector.load %arg8[%c0_59, %c0_60] : memref<128x3xf32, #tpu.memory_space<vmem>>, vector<128x3xf32>
    tpu.vector_store %arg8[%c0_59, %c0_60], %99 {strides = array<i32>} : memref<128x3xf32, #tpu.memory_space<vmem>>, vector<128x3xf32>,
    return
  }
  func.func @transform_0(%arg0: i32) -> (i32, i32) {
    %c0_i32 = arith.constant 0 : i32
    %c0_i32_0 = arith.constant 0 : i32
    return %arg0, %c0_i32 : i32, i32
  }
  func.func @transform_1(%arg0: i32) -> (i32, i32) {
    %c0_i32 = arith.constant 0 : i32
    %c0_i32_0 = arith.constant 0 : i32
    return %arg0, %c0_i32 : i32, i32
  }
  func.func @transform_2(%arg0: i32) -> (i32, i32) {
    %c0_i32 = arith.constant 0 : i32
    %c0_i32_0 = arith.constant 0 : i32
    %c0_i32_1 = arith.constant 0 : i32
    return %c0_i32, %c0_i32_0 : i32, i32
  }
  func.func @transform_3(%arg0: i32) -> (i32, i32) {
    %c0_i32 = arith.constant 0 : i32
    %c0_i32_0 = arith.constant 0 : i32
    %c0_i32_1 = arith.constant 0 : i32
    return %c0_i32, %c0_i32_0 : i32, i32
  }
  func.func @transform_4(%arg0: i32) -> (i32, i32) {
    %c0_i32 = arith.constant 0 : i32
    %c0_i32_0 = arith.constant 0 : i32
    %c0_i32_1 = arith.constant 0 : i32
    return %c0_i32, %c0_i32_0 : i32, i32
  }
  func.func @transform_5(%arg0: i32) -> (i32, i32) {
    %c0_i32 = arith.constant 0 : i32
    %c0_i32_0 = arith.constant 0 : i32
    return %arg0, %c0_i32 : i32, i32
  }
  func.func @transform_6(%arg0: i32) -> (i32, i32) {
    %c0_i32 = arith.constant 0 : i32
    %c0_i32_0 = arith.constant 0 : i32
    %c0_i32_1 = arith.constant 0 : i32
    return %c0_i32, %c0_i32_0 : i32, i32
  }
  func.func @transform_7(%arg0: i32) -> (i32, i32) {
    %c0_i32 = arith.constant 0 : i32
    %c0_i32_0 = arith.constant 0 : i32
    %c0_i32_1 = arith.constant 0 : i32
    return %c0_i32, %c0_i32_0 : i32, i32
  }
}

</mosaic_0001>

<llo_original>
// kernel: tpu_custom_call.1
$region0: #{tpu_custom_call.1}
  #allocation0 [shape = 'u32[]', space=smem, size = 0x4, offset = 0x4, fixed_abs, tag = 'smem constant byte address 0x4 - core index']
  #allocation1 [shape = 'u32[144,128]{1,0:T(1,128)}', space=vmem, size = 0x12000, scoped, tag = 'internal scratch']
  #allocation2 [shape = 'f32[8,128]{1,0:T(8,128)}', space=vmem, size = 0x1000, scoped, tag = 'scratch operand']
  %s0 = inlined_call_operand.vmem [shape: f32[64,5], index: 0, kind: input, shape index: {}]
  %s1 = inlined_call_operand.vmem [shape: f32[64,3], index: 1, kind: input, shape index: {}]
  %s2 = inlined_call_operand.vmem [shape: f32[5,128], index: 2, kind: input, shape index: {}]
  %s3 = inlined_call_operand.vmem [shape: f32[128,128], index: 3, kind: input, shape index: {}]
  %s4 = inlined_call_operand.vmem [shape: f32[8,128], index: 4, kind: input, shape index: {}]
  %s5 = inlined_call_operand.hbm [shape: f32[64,128], index: 5, kind: output, shape index: {0}]
  %s6 = inlined_call_operand.hbm [shape: f32[128,128], index: 6, kind: output, shape index: {1}]
  %s7 = inlined_call_operand.vmem [shape: f32[128,3], index: 7, kind: output, shape index: {2}]
  %8 = xla_tuple %s5, %s6, %s7
  %s9 = sld [smem:[#allocation0]]
  $region50: #{tpu_custom_call.1} parent=0
    _
  %s11 = ssub.s32 1, %s9
  %s12 = scalar_select 0, %s11, %s9
  $region1: #{tpu_custom_call.1} parent=0
    #allocation3 [shape = 'u8[32768]{0}', space=vmem, size = 0x8000, scoped, tag = 'output window, operand 0, single buffered']
    #allocation4 [shape = 's32[1]{0}', space=sflag, size = 0x4, scoped, tag = 'scoped memory for tpu_custom_call.1']
    #allocation5 [shape = 'u8[65536]{0}', space=vmem, size = 0x10000, scoped, tag = 'output window, operand 1, single buffered']
    #allocation6 [shape = 's32[1]{0}', space=sflag, size = 0x4, scoped, tag = 'scoped memory for tpu_custom_call.1']
    %13 = vsyncpa [#allocation4], 0
    %14 = vsyncpa [#allocation6], 0
    // Predicated region
    $region2: #{tpu_custom_call.1} parent=1 // pred_check
      _
    $region3: #{tpu_custom_call.1} parent=1 // pred_check_branch
      %16 = sbr.rel (0) target = $region5
    $region4: #{tpu_custom_call.1} parent=1 // pred_region
      _
    $region5: #{tpu_custom_call.1} parent=1 // pred_fallthru
      _
    // Predicated region
    $region6: #{tpu_custom_call.1} parent=1 // pred_check
      _
    $region7: #{tpu_custom_call.1} parent=1 // pred_check_branch
      %18 = sbr.rel (0) target = $region9
    $region8: #{tpu_custom_call.1} parent=1 // pred_region
      _
    $region9: #{tpu_custom_call.1} parent=1 // pred_fallthru
      _
    // Predicated region
    $region10: #{tpu_custom_call.1} parent=1 // pred_check
      _
    $region11: #{tpu_custom_call.1} parent=1 // pred_check_branch
      %20 = sbr.rel (0) target = $region13
    $region12: #{tpu_custom_call.1} parent=1 // pred_region
      _
    $region13: #{tpu_custom_call.1} parent=1 // pred_fallthru
      _
    // Predicated region
    $region14: #{tpu_custom_call.1} parent=1 // pred_check
      _
    $region15: #{tpu_custom_call.1} parent=1 // pred_check_branch
      %22 = sbr.rel (0) target = $region17
    $region16: #{tpu_custom_call.1} parent=1 // pred_region
      _
    $region17: #{tpu_custom_call.1} parent=1 // pred_fallthru
      _
    // Predicated region
    $region18: #{tpu_custom_call.1} parent=1 // pred_check
      _
    $region19: #{tpu_custom_call.1} parent=1 // pred_check_branch
      %24 = sbr.rel (0) target = $region21
    $region20: #{tpu_custom_call.1} parent=1 // pred_region
      _
    $region21: #{tpu_custom_call.1} parent=1 // pred_fallthru
      _
    %p25 = scmp.eq.s32.totalorder 0, 0
    // Predicated region
    $region22: #{tpu_custom_call.1} parent=1 // pred_check
      %p26 = pneg %p25
    $region23: #{tpu_custom_call.1} parent=1 // pred_check_branch
      %28 = sbr.rel (%p26) target = $region25
    $region24: #{tpu_custom_call.1} parent=1 // pred_region
      %29 = vst [vmem:[#allocation2] sm:$0xff] 0.0
      %30 = vst [vmem:[#allocation5] sm:$0xff] 0.0
      %31 = vst [vmem:[#allocation5 + $0x8] sm:$0xff] 0.0
      %32 = vst [vmem:[#allocation5 + $0x10] sm:$0xff] 0.0
      %33 = vst [vmem:[#allocation5 + $0x18] sm:$0xff] 0.0
      %34 = vst [vmem:[#allocation5 + $0x20] sm:$0xff] 0.0
      %35 = vst [vmem:[#allocation5 + $0x28] sm:$0xff] 0.0
      %36 = vst [vmem:[#allocation5 + $0x30] sm:$0xff] 0.0
      %37 = vst [vmem:[#allocation5 + $0x38] sm:$0xff] 0.0
      %38 = vst [vmem:[#allocation5 + $0x40] sm:$0xff] 0.0
      %39 = vst [vmem:[#allocation5 + $0x48] sm:$0xff] 0.0
      %40 = vst [vmem:[#allocation5 + $0x50] sm:$0xff] 0.0
      %41 = vst [vmem:[#allocation5 + $0x58] sm:$0xff] 0.0
      %42 = vst [vmem:[#allocation5 + $0x60] sm:$0xff] 0.0
      %43 = vst [vmem:[#allocation5 + $0x68] sm:$0xff] 0.0
      %44 = vst [vmem:[#allocation5 + $0x70] sm:$0xff] 0.0
      %45 = vst [vmem:[#allocation5 + $0x78] sm:$0xff] 0.0
      %vm46 = vcmask 23552
      %47 = vst.msk [vmem:[%s7] sm:$0xff] %vm46, 0.0
      %48 = vst.msk [vmem:[%s7 + $0x8] sm:$0xff] %vm46, 0.0
      %49 = vst.msk [vmem:[%s7 + $0x10] sm:$0xff] %vm46, 0.0
      %50 = vst.msk [vmem:[%s7 + $0x18] sm:$0xff] %vm46, 0.0
      %51 = vst.msk [vmem:[%s7 + $0x20] sm:$0xff] %vm46, 0.0
      %52 = vst.msk [vmem:[%s7 + $0x28] sm:$0xff] %vm46, 0.0
      %53 = vst.msk [vmem:[%s7 + $0x30] sm:$0xff] %vm46, 0.0
      %54 = vst.msk [vmem:[%s7 + $0x38] sm:$0xff] %vm46, 0.0
      %55 = vst.msk [vmem:[%s7 + $0x40] sm:$0xff] %vm46, 0.0
      %56 = vst.msk [vmem:[%s7 + $0x48] sm:$0xff] %vm46, 0.0
      %57 = vst.msk [vmem:[%s7 + $0x50] sm:$0xff] %vm46, 0.0
      %58 = vst.msk [vmem:[%s7 + $0x58] sm:$0xff] %vm46, 0.0
      %59 = vst.msk [vmem:[%s7 + $0x60] sm:$0xff] %vm46, 0.0
      %60 = vst.msk [vmem:[%s7 + $0x68] sm:$0xff] %vm46, 0.0
      %61 = vst.msk [vmem:[%s7 + $0x70] sm:$0xff] %vm46, 0.0
      %62 = vst.msk [vmem:[%s7 + $0x78] sm:$0xff] %vm46, 0.0
    $region25: #{tpu_custom_call.1} parent=1 // pred_fallthru
      _
    %v63 = vld [vmem:[%s0] sm:$0xff]
    %v64 = vld [vmem:[%s0 + $0x8] sm:$0xff]
    %v65 = vld [vmem:[%s0 + $0x10] sm:$0xff]
    %v66 = vld [vmem:[%s0 + $0x18] sm:$0xff]
    %v67 = vld [vmem:[%s0 + $0x20] sm:$0xff]
    %v68 = vld [vmem:[%s0 + $0x28] sm:$0xff]
    %v69 = vld [vmem:[%s0 + $0x30] sm:$0xff]
    %v70 = vld [vmem:[%s0 + $0x38] sm:$0xff]
    %v71 = vld [vmem:[%s2] sm:$0x1f]
    %vm72 = vcmask 39936
    %v74 = vsel %vm72, %v63, 0
    %v77 = vsel %vm72, %v64, 0
    %v80 = vsel %vm72, %v65, 0
    %v83 = vsel %vm72, %v66, 0
    %v86 = vsel %vm72, %v67, 0
    %v89 = vsel %vm72, %v68, 0
    %v92 = vsel %vm72, %v69, 0
    %v95 = vsel %vm72, %v70, 0
    %vm97 = vcmask 1044480
    %v99 = vsel %vm97, %v71, 0
    %101 = vmatprep.subr.mxu0 0.0
    %102 = vmatpush1.msra.mxu0 0.0
    %103 = vmatprep.subr.mxu0 0.0
    %104 = vmatpush1.msra.mxu0 0.0
    %105 = vmatprep.subr.mxu0 0.0
    %106 = vmatpush1.msra.mxu0 0.0
    %107 = vmatprep.subr.mxu0 0.0
    %108 = vmatpush1.msra.mxu0 0.0
    %109 = vmatprep.subr.mxu0 0.0
    %110 = vmatpush1.msra.mxu0 0.0
    %111 = vmatprep.subr.mxu0 0.0
    %112 = vmatpush1.msra.mxu0 0.0
    %113 = vmatprep.subr.mxu0 0.0
    %114 = vmatpush1.msra.mxu0 0.0
    %115 = vmatprep.subr.mxu0 0.0
    %116 = vmatpush1.msra.mxu0 0.0
    %117 = vmatprep.subr.mxu0 0.0
    %118 = vmatpush1.msra.mxu0 0.0
    %119 = vmatprep.subr.mxu0 0.0
    %120 = vmatpush1.msra.mxu0 0.0
    %121 = vmatprep.subr.mxu0 0.0
    %122 = vmatpush1.msra.mxu0 0.0
    %123 = vmatprep.subr.mxu0 0.0
    %124 = vmatpush1.msra.mxu0 0.0
    %125 = vmatprep.subr.mxu0 0.0
    %126 = vmatpush1.msra.mxu0 0.0
    %127 = vmatprep.subr.mxu0 0.0
    %128 = vmatpush1.msra.mxu0 0.0
    %129 = vmatprep.subr.mxu0 0.0
    %130 = vmatpush1.msra.mxu0 0.0
    %131 = vmatprep.subr.mxu0 0.0
    %132 = vmatpush1.msra.mxu0 %v99
    %133 = vmatprep.subr.mxu0 0.0
    %134 = vmatpush2.msra.mxu0 0.0
    %135 = vmatprep.subr.mxu0 0.0
    %136 = vmatpush2.msra.mxu0 0.0
    %137 = vmatprep.subr.mxu0 0.0
    %138 = vmatpush2.msra.mxu0 0.0
    %139 = vmatprep.subr.mxu0 0.0
    %140 = vmatpush2.msra.mxu0 0.0
    %141 = vmatprep.subr.mxu0 0.0
    %142 = vmatpush2.msra.mxu0 0.0
    %143 = vmatprep.subr.mxu0 0.0
    %144 = vmatpush2.msra.mxu0 0.0
    %145 = vmatprep.subr.mxu0 0.0
    %146 = vmatpush2.msra.mxu0 0.0
    %147 = vmatprep.subr.mxu0 0.0
    %148 = vmatpush2.msra.mxu0 0.0
    %149 = vmatprep.subr.mxu0 0.0
    %150 = vmatpush2.msra.mxu0 0.0
    %151 = vmatprep.subr.mxu0 0.0
    %152 = vmatpush2.msra.mxu0 0.0
    %153 = vmatprep.subr.mxu0 0.0
    %154 = vmatpush2.msra.mxu0 0.0
    %155 = vmatprep.subr.mxu0 0.0
    %156 = vmatpush2.msra.mxu0 0.0
    %157 = vmatprep.subr.mxu0 0.0
    %158 = vmatpush2.msra.mxu0 0.0
    %159 = vmatprep.subr.mxu0 0.0
    %160 = vmatpush2.msra.mxu0 0.0
    %161 = vmatprep.subr.mxu0 0.0
    %162 = vmatpush2.msra.mxu0 0.0
    %163 = vmatprep.subr.mxu0 0.0
    %164 = vmatpush2.msra.mxu0 0.0
    %165 = vmatprep.mubr.f32.mxu0 0.0
    %166 = vmatmul.mubr.f32.gmra.mxu0 %v74
    %v167 = vpop.f32.mrf.mxu0
    %v168 = vadd.f32 0.0, %v167
    %v169 = vpop.f32.mrf.mxu0
    %170 = vmatprep.mubr.f32.mxu0 0.0
    %171 = vmatmul.mubr.f32.gmra.mxu0 %v77
    %v172 = vpop.f32.mrf.mxu0
    %v173 = vadd.f32 0.0, %v172
    %v174 = vpop.f32.mrf.mxu0
    %175 = vmatprep.mubr.f32.mxu0 0.0
    %176 = vmatmul.mubr.f32.gmra.mxu0 %v80
    %v177 = vpop.f32.mrf.mxu0
    %v178 = vadd.f32 0.0, %v177
    %v179 = vpop.f32.mrf.mxu0
    %180 = vmatprep.mubr.f32.mxu0 0.0
    %181 = vmatmul.mubr.f32.gmra.mxu0 %v83
    %v182 = vpop.f32.mrf.mxu0
    %v183 = vadd.f32 0.0, %v182
    %v184 = vpop.f32.mrf.mxu0
    %185 = vmatprep.mubr.f32.mxu0 0.0
    %186 = vmatmul.mubr.f32.gmra.mxu0 %v86
    %v187 = vpop.f32.mrf.mxu0
    %v188 = vadd.f32 0.0, %v187
    %v189 = vpop.f32.mrf.mxu0
    %190 = vmatprep.mubr.f32.mxu0 0.0
    %191 = vmatmul.mubr.f32.gmra.mxu0 %v89
    %v192 = vpop.f32.mrf.mxu0
    %v193 = vadd.f32 0.0, %v192
    %v194 = vpop.f32.mrf.mxu0
    %195 = vmatprep.mubr.f32.mxu0 0.0
    %196 = vmatmul.mubr.f32.gmra.mxu0 %v92
    %v197 = vpop.f32.mrf.mxu0
    %v198 = vadd.f32 0.0, %v197
    %v199 = vpop.f32.mrf.mxu0
    %200 = vmatprep.mubr.f32.mxu0 0.0
    %201 = vmatmul.mubr.f32.gmra.mxu0 %v95
    %v202 = vpop.f32.mrf.mxu0
    %v203 = vadd.f32 0.0, %v202
    %v204 = vpop.f32.mrf.mxu0
    %205 = vdwg.mxu0
    %206 = vst [vmem:[#allocation3] sm:$0xff] %v168
    %207 = vst [vmem:[#allocation3 + $0x8] sm:$0xff] %v173
    %208 = vst [vmem:[#allocation3 + $0x10] sm:$0xff] %v178
    %209 = vst [vmem:[#allocation3 + $0x18] sm:$0xff] %v183
    %210 = vst [vmem:[#allocation3 + $0x20] sm:$0xff] %v188
    %211 = vst [vmem:[#allocation3 + $0x28] sm:$0xff] %v193
    %212 = vst [vmem:[#allocation3 + $0x30] sm:$0xff] %v198
    %213 = vst [vmem:[#allocation3 + $0x38] sm:$0xff] %v203
    %v214 = vld [vmem:[%s3] sm:$0xff]
    %v215 = vld [vmem:[%s3 + $0x8] sm:$0xff]
    %v216 = vld [vmem:[%s3 + $0x10] sm:$0xff]
    %v217 = vld [vmem:[%s3 + $0x18] sm:$0xff]
    %v218 = vld [vmem:[%s3 + $0x20] sm:$0xff]
    %v219 = vld [vmem:[%s3 + $0x28] sm:$0xff]
    %v220 = vld [vmem:[%s3 + $0x30] sm:$0xff]
    %v221 = vld [vmem:[%s3 + $0x38] sm:$0xff]
    %v222 = vld [vmem:[%s3 + $0x40] sm:$0xff]
    %v223 = vld [vmem:[%s3 + $0x48] sm:$0xff]
    %v224 = vld [vmem:[%s3 + $0x50] sm:$0xff]
    %v225 = vld [vmem:[%s3 + $0x58] sm:$0xff]
    %v226 = vld [vmem:[%s3 + $0x60] sm:$0xff]
    %v227 = vld [vmem:[%s3 + $0x68] sm:$0xff]
    %v228 = vld [vmem:[%s3 + $0x70] sm:$0xff]
    %v229 = vld [vmem:[%s3 + $0x78] sm:$0xff]
    %v230 = vld [vmem:[%s4] sm:$0xff]
    %v231 = vld [vmem:[#allocation2] sm:$0xff]
    %v232 = vld [vmem:[#allocation3] sm:$0xff]
    %233 = vmatprep.subr.mxu0 0.0
    %234 = vmatpush1.msra.mxu0 %v229
    %235 = vmatprep.subr.mxu0 0.0
    %236 = vmatpush1.msra.mxu0 %v228
    %237 = vmatprep.subr.mxu0 0.0
    %238 = vmatpush1.msra.mxu0 %v227
    %239 = vmatprep.subr.mxu0 0.0
    %240 = vmatpush1.msra.mxu0 %v226
    %241 = vmatprep.subr.mxu0 0.0
    %242 = vmatpush1.msra.mxu0 %v225
    %243 = vmatprep.subr.mxu0 0.0
    %244 = vmatpush1.msra.mxu0 %v224
    %245 = vmatprep.subr.mxu0 0.0
    %246 = vmatpush1.msra.mxu0 %v223
    %247 = vmatprep.subr.mxu0 0.0
    %248 = vmatpush1.msra.mxu0 %v222
    %249 = vmatprep.subr.mxu0 0.0
    %250 = vmatpush1.msra.mxu0 %v221
    %251 = vmatprep.subr.mxu0 0.0
    %252 = vmatpush1.msra.mxu0 %v220
    %253 = vmatprep.subr.mxu0 0.0
    %254 = vmatpush1.msra.mxu0 %v219
    %255 = vmatprep.subr.mxu0 0.0
    %256 = vmatpush1.msra.mxu0 %v218
    %257 = vmatprep.subr.mxu0 0.0
    %258 = vmatpush1.msra.mxu0 %v217
    %259 = vmatprep.subr.mxu0 0.0
    %260 = vmatpush1.msra.mxu0 %v216
    %261 = vmatprep.subr.mxu0 0.0
    %262 = vmatpush1.msra.mxu0 %v215
    %263 = vmatprep.subr.mxu0 0.0
    %264 = vmatpush1.msra.mxu0 %v214
    %265 = vmatprep.subr.mxu0 0.0
    %266 = vmatpush2.msra.mxu0 0.0
    %267 = vmatprep.subr.mxu0 0.0
    %268 = vmatpush2.msra.mxu0 0.0
    %269 = vmatprep.subr.mxu0 0.0
    %270 = vmatpush2.msra.mxu0 0.0
    %271 = vmatprep.subr.mxu0 0.0
    %272 = vmatpush2.msra.mxu0 0.0
    %273 = vmatprep.subr.mxu0 0.0
    %274 = vmatpush2.msra.mxu0 0.0
    %275 = vmatprep.subr.mxu0 0.0
    %276 = vmatpush2.msra.mxu0 0.0
    %277 = vmatprep.subr.mxu0 0.0
    %278 = vmatpush2.msra.mxu0 0.0
    %279 = vmatprep.subr.mxu0 0.0
    %280 = vmatpush2.msra.mxu0 0.0
    %281 = vmatprep.subr.mxu0 0.0
    %282 = vmatpush2.msra.mxu0 0.0
    %283 = vmatprep.subr.mxu0 0.0
    %284 = vmatpush2.msra.mxu0 0.0
    %285 = vmatprep.subr.mxu0 0.0
    %286 = vmatpush2.msra.mxu0 0.0
    %287 = vmatprep.subr.mxu0 0.0
    %288 = vmatpush2.msra.mxu0 0.0
    %289 = vmatprep.subr.mxu0 0.0
    %290 = vmatpush2.msra.mxu0 0.0
    %291 = vmatprep.subr.mxu0 0.0
    %292 = vmatpush2.msra.mxu0 0.0
    %293 = vmatprep.subr.mxu0 0.0
    %294 = vmatpush2.msra.mxu0 0.0
    %295 = vmatprep.subr.mxu0 0.0
    %296 = vmatpush2.msra.mxu0 0.0
    %297 = vmatprep.mubr.f32.mxu0 0.0
    %298 = vmatmul.mubr.f32.gmra.mxu0 %v231
    %v299 = vpop.f32.mrf.mxu0
    %v300 = vadd.f32 0.0, %v299
    %v301 = vpop.f32.mrf.mxu0
    %302 = vdwg.mxu0
    %v303 = vadd.f32 %v232, %v300
    %v304 = vtanh.pop %v303
    %v305 = vadd.f32 %v304, %v230
    %306 = vst [vmem:[#allocation3] sm:$0xff] %v305
    %s307 = scalar_lea.vmem [#allocation3], 8
    %v308 = vld [vmem:[%s307] sm:$0xff]
    %309 = vmatprep.subr.mxu0 0.0
    %310 = vmatpush1.msra.mxu0 %v229
    %311 = vmatprep.subr.mxu0 0.0
    %312 = vmatpush1.msra.mxu0 %v228
    %313 = vmatprep.subr.mxu0 0.0
    %314 = vmatpush1.msra.mxu0 %v227
    %315 = vmatprep.subr.mxu0 0.0
    %316 = vmatpush1.msra.mxu0 %v226
    %317 = vmatprep.subr.mxu0 0.0
    %318 = vmatpush1.msra.mxu0 %v225
    %319 = vmatprep.subr.mxu0 0.0
    %320 = vmatpush1.msra.mxu0 %v224
    %321 = vmatprep.subr.mxu0 0.0
    %322 = vmatpush1.msra.mxu0 %v223
    %323 = vmatprep.subr.mxu0 0.0
    %324 = vmatpush1.msra.mxu0 %v222
    %325 = vmatprep.subr.mxu0 0.0
    %326 = vmatpush1.msra.mxu0 %v221
    %327 = vmatprep.subr.mxu0 0.0
    %328 = vmatpush1.msra.mxu0 %v220
    %329 = vmatprep.subr.mxu0 0.0
    %330 = vmatpush1.msra.mxu0 %v219
    %331 = vmatprep.subr.mxu0 0.0
    %332 = vmatpush1.msra.mxu0 %v218
    %333 = vmatprep.subr.mxu0 0.0
    %334 = vmatpush1.msra.mxu0 %v217
    %335 = vmatprep.subr.mxu0 0.0
    %336 = vmatpush1.msra.mxu0 %v216
    %337 = vmatprep.subr.mxu0 0.0
    %338 = vmatpush1.msra.mxu0 %v215
    %339 = vmatprep.subr.mxu0 0.0
    %340 = vmatpush1.msra.mxu0 %v214
    %341 = vmatprep.subr.mxu0 0.0
    %342 = vmatpush2.msra.mxu0 0.0
    %343 = vmatprep.subr.mxu0 0.0
    %344 = vmatpush2.msra.mxu0 0.0
    %345 = vmatprep.subr.mxu0 0.0
    %346 = vmatpush2.msra.mxu0 0.0
    %347 = vmatprep.subr.mxu0 0.0
    %348 = vmatpush2.msra.mxu0 0.0
    %349 = vmatprep.subr.mxu0 0.0
    %350 = vmatpush2.msra.mxu0 0.0
    %351 = vmatprep.subr.mxu0 0.0
    %352 = vmatpush2.msra.mxu0 0.0
    %353 = vmatprep.subr.mxu0 0.0
    %354 = vmatpush2.msra.mxu0 0.0
    %355 = vmatprep.subr.mxu0 0.0
    %356 = vmatpush2.msra.mxu0 0.0
    %357 = vmatprep.subr.mxu0 0.0
    %358 = vmatpush2.msra.mxu0 0.0
    %359 = vmatprep.subr.mxu0 0.0
    %360 = vmatpush2.msra.mxu0 0.0
    %361 = vmatprep.subr.mxu0 0.0
    %362 = vmatpush2.msra.mxu0 0.0
    %363 = vmatprep.subr.mxu0 0.0
    %364 = vmatpush2.msra.mxu0 0.0
    %365 = vmatprep.subr.mxu0 0.0
    %366 = vmatpush2.msra.mxu0 0.0
    %367 = vmatprep.subr.mxu0 0.0
    %368 = vmatpush2.msra.mxu0 0.0
    %369 = vmatprep.subr.mxu0 0.0
    %370 = vmatpush2.msra.mxu0 0.0
    %371 = vmatprep.subr.mxu0 0.0
    %372 = vmatpush2.msra.mxu0 0.0
    %373 = vmatprep.mubr.f32.mxu0 0.0
    %374 = vmatmul.mubr.f32.gmra.mxu0 %v304
    %v375 = vpop.f32.mrf.mxu0
    %v376 = vadd.f32 0.0, %v375
    %v377 = vpop.f32.mrf.mxu0
    %378 = vdwg.mxu0
    %v379 = vadd.f32 %v308, %v376
    %v380 = vtanh.pop %v379
    %v381 = vadd.f32 %v380, %v230
    %382 = vst [vmem:[%s307] sm:$0xff] %v381
    %s383 = scalar_lea.vmem [#allocation3], 16
    %v384 = vld [vmem:[%s383] sm:$0xff]
    %385 = vmatprep.subr.mxu0 0.0
    %386 = vmatpush1.msra.mxu0 %v229
    %387 = vmatprep.subr.mxu0 0.0
    %388 = vmatpush1.msra.mxu0 %v228
    %389 = vmatprep.subr.mxu0 0.0
    %390 = vmatpush1.msra.mxu0 %v227
    %391 = vmatprep.subr.mxu0 0.0
    %392 = vmatpush1.msra.mxu0 %v226
    %393 = vmatprep.subr.mxu0 0.0
    %394 = vmatpush1.msra.mxu0 %v225
    %395 = vmatprep.subr.mxu0 0.0
    %396 = vmatpush1.msra.mxu0 %v224
    %397 = vmatprep.subr.mxu0 0.0
    %398 = vmatpush1.msra.mxu0 %v223
    %399 = vmatprep.subr.mxu0 0.0
    %400 = vmatpush1.msra.mxu0 %v222
    %401 = vmatprep.subr.mxu0 0.0
    %402 = vmatpush1.msra.mxu0 %v221
    %403 = vmatprep.subr.mxu0 0.0
    %404 = vmatpush1.msra.mxu0 %v220
    %405 = vmatprep.subr.mxu0 0.0
    %406 = vmatpush1.msra.mxu0 %v219
    %407 = vmatprep.subr.mxu0 0.0
    %408 = vmatpush1.msra.mxu0 %v218
    %409 = vmatprep.subr.mxu0 0.0
    %410 = vmatpush1.msra.mxu0 %v217
    %411 = vmatprep.subr.mxu0 0.0
    %412 = vmatpush1.msra.mxu0 %v216
    %413 = vmatprep.subr.mxu0 0.0
    %414 = vmatpush1.msra.mxu0 %v215
    %415 = vmatprep.subr.mxu0 0.0
    %416 = vmatpush1.msra.mxu0 %v214
    %417 = vmatprep.subr.mxu0 0.0
    %418 = vmatpush2.msra.mxu0 0.0
    %419 = vmatprep.subr.mxu0 0.0
    %420 = vmatpush2.msra.mxu0 0.0
    %421 = vmatprep.subr.mxu0 0.0
    %422 = vmatpush2.msra.mxu0 0.0
    %423 = vmatprep.subr.mxu0 0.0
    %424 = vmatpush2.msra.mxu0 0.0
    %425 = vmatprep.subr.mxu0 0.0
    %426 = vmatpush2.msra.mxu0 0.0
    %427 = vmatprep.subr.mxu0 0.0
    %428 = vmatpush2.msra.mxu0 0.0
    %429 = vmatprep.subr.mxu0 0.0
    %430 = vmatpush2.msra.mxu0 0.0
    %431 = vmatprep.subr.mxu0 0.0
    %432 = vmatpush2.msra.mxu0 0.0
    %433 = vmatprep.subr.mxu0 0.0
    %434 = vmatpush2.msra.mxu0 0.0
    %435 = vmatprep.subr.mxu0 0.0
    %436 = vmatpush2.msra.mxu0 0.0
    %437 = vmatprep.subr.mxu0 0.0
    %438 = vmatpush2.msra.mxu0 0.0
    %439 = vmatprep.subr.mxu0 0.0
    %440 = vmatpush2.msra.mxu0 0.0
    %441 = vmatprep.subr.mxu0 0.0
    %442 = vmatpush2.msra.mxu0 0.0
    %443 = vmatprep.subr.mxu0 0.0
    %444 = vmatpush2.msra.mxu0 0.0
    %445 = vmatprep.subr.mxu0 0.0
    %446 = vmatpush2.msra.mxu0 0.0
    %447 = vmatprep.subr.mxu0 0.0
    %448 = vmatpush2.msra.mxu0 0.0
    %449 = vmatprep.mubr.f32.mxu0 0.0
    %450 = vmatmul.mubr.f32.gmra.mxu0 %v380
    %v451 = vpop.f32.mrf.mxu0
    %v452 = vadd.f32 0.0, %v451
    %v453 = vpop.f32.mrf.mxu0
    %454 = vdwg.mxu0
    %v455 = vadd.f32 %v384, %v452
    %v456 = vtanh.pop %v455
    %v457 = vadd.f32 %v456, %v230
    %458 = vst [vmem:[%s383] sm:$0xff] %v457
    %s459 = scalar_lea.vmem [#allocation3], 24
    %v460 = vld [vmem:[%s459] sm:$0xff]
    %461 = vmatprep.subr.mxu0 0.0
    %462 = vmatpush1.msra.mxu0 %v229
    %463 = vmatprep.subr.mxu0 0.0
    %464 = vmatpush1.msra.mxu0 %v228
    %465 = vmatprep.subr.mxu0 0.0
    %466 = vmatpush1.msra.mxu0 %v227
    %467 = vmatprep.subr.mxu0 0.0
    %468 = vmatpush1.msra.mxu0 %v226
    %469 = vmatprep.subr.mxu0 0.0
    %470 = vmatpush1.msra.mxu0 %v225
    %471 = vmatprep.subr.mxu0 0.0
    %472 = vmatpush1.msra.mxu0 %v224
    %473 = vmatprep.subr.mxu0 0.0
    %474 = vmatpush1.msra.mxu0 %v223
    %475 = vmatprep.subr.mxu0 0.0
    %476 = vmatpush1.msra.mxu0 %v222
    %477 = vmatprep.subr.mxu0 0.0
    %478 = vmatpush1.msra.mxu0 %v221
    %479 = vmatprep.subr.mxu0 0.0
    %480 = vmatpush1.msra.mxu0 %v220
    %481 = vmatprep.subr.mxu0 0.0
    %482 = vmatpush1.msra.mxu0 %v219
    %483 = vmatprep.subr.mxu0 0.0
    %484 = vmatpush1.msra.mxu0 %v218
    %485 = vmatprep.subr.mxu0 0.0
    %486 = vmatpush1.msra.mxu0 %v217
    %487 = vmatprep.subr.mxu0 0.0
    %488 = vmatpush1.msra.mxu0 %v216
    %489 = vmatprep.subr.mxu0 0.0
    %490 = vmatpush1.msra.mxu0 %v215
    %491 = vmatprep.subr.mxu0 0.0
    %492 = vmatpush1.msra.mxu0 %v214
    %493 = vmatprep.subr.mxu0 0.0
    %494 = vmatpush2.msra.mxu0 0.0
    %495 = vmatprep.subr.mxu0 0.0
    %496 = vmatpush2.msra.mxu0 0.0
    %497 = vmatprep.subr.mxu0 0.0
    %498 = vmatpush2.msra.mxu0 0.0
    %499 = vmatprep.subr.mxu0 0.0
    %500 = vmatpush2.msra.mxu0 0.0
    %501 = vmatprep.subr.mxu0 0.0
    %502 = vmatpush2.msra.mxu0 0.0
    %503 = vmatprep.subr.mxu0 0.0
    %504 = vmatpush2.msra.mxu0 0.0
    %505 = vmatprep.subr.mxu0 0.0
    %506 = vmatpush2.msra.mxu0 0.0
    %507 = vmatprep.subr.mxu0 0.0
    %508 = vmatpush2.msra.mxu0 0.0
    %509 = vmatprep.subr.mxu0 0.0
    %510 = vmatpush2.msra.mxu0 0.0
    %511 = vmatprep.subr.mxu0 0.0
    %512 = vmatpush2.msra.mxu0 0.0
    %513 = vmatprep.subr.mxu0 0.0
    %514 = vmatpush2.msra.mxu0 0.0
    %515 = vmatprep.subr.mxu0 0.0
    %516 = vmatpush2.msra.mxu0 0.0
    %517 = vmatprep.subr.mxu0 0.0
    %518 = vmatpush2.msra.mxu0 0.0
    %519 = vmatprep.subr.mxu0 0.0
    %520 = vmatpush2.msra.mxu0 0.0
    %521 = vmatprep.subr.mxu0 0.0
    %522 = vmatpush2.msra.mxu0 0.0
    %523 = vmatprep.subr.mxu0 0.0
    %524 = vmatpush2.msra.mxu0 0.0
    %525 = vmatprep.mubr.f32.mxu0 0.0
    %526 = vmatmul.mubr.f32.gmra.mxu0 %v456
    %v527 = vpop.f32.mrf.mxu0
    %v528 = vadd.f32 0.0, %v527
    %v529 = vpop.f32.mrf.mxu0
    %530 = vdwg.mxu0
    %v531 = vadd.f32 %v460, %v528
    %v532 = vtanh.pop %v531
    %v533 = vadd.f32 %v532, %v230
    %534 = vst [vmem:[%s459] sm:$0xff] %v533
    %s535 = scalar_lea.vmem [#allocation3], 32
    %v536 = vld [vmem:[%s535] sm:$0xff]
    %537 = vmatprep.subr.mxu0 0.0
    %538 = vmatpush1.msra.mxu0 %v229
    %539 = vmatprep.subr.mxu0 0.0
    %540 = vmatpush1.msra.mxu0 %v228
    %541 = vmatprep.subr.mxu0 0.0
    %542 = vmatpush1.msra.mxu0 %v227
    %543 = vmatprep.subr.mxu0 0.0
    %544 = vmatpush1.msra.mxu0 %v226
    %545 = vmatprep.subr.mxu0 0.0
    %546 = vmatpush1.msra.mxu0 %v225
    %547 = vmatprep.subr.mxu0 0.0
    %548 = vmatpush1.msra.mxu0 %v224
    %549 = vmatprep.subr.mxu0 0.0
    %550 = vmatpush1.msra.mxu0 %v223
    %551 = vmatprep.subr.mxu0 0.0
    %552 = vmatpush1.msra.mxu0 %v222
    %553 = vmatprep.subr.mxu0 0.0
    %554 = vmatpush1.msra.mxu0 %v221
    %555 = vmatprep.subr.mxu0 0.0
    %556 = vmatpush1.msra.mxu0 %v220
    %557 = vmatprep.subr.mxu0 0.0
    %558 = vmatpush1.msra.mxu0 %v219
    %559 = vmatprep.subr.mxu0 0.0
    %560 = vmatpush1.msra.mxu0 %v218
    %561 = vmatprep.subr.mxu0 0.0
    %562 = vmatpush1.msra.mxu0 %v217
    %563 = vmatprep.subr.mxu0 0.0
    %564 = vmatpush1.msra.mxu0 %v216
    %565 = vmatprep.subr.mxu0 0.0
    %566 = vmatpush1.msra.mxu0 %v215
    %567 = vmatprep.subr.mxu0 0.0
    %568 = vmatpush1.msra.mxu0 %v214
    %569 = vmatprep.subr.mxu0 0.0
    %570 = vmatpush2.msra.mxu0 0.0
    %571 = vmatprep.subr.mxu0 0.0
    %572 = vmatpush2.msra.mxu0 0.0
    %573 = vmatprep.subr.mxu0 0.0
    %574 = vmatpush2.msra.mxu0 0.0
    %575 = vmatprep.subr.mxu0 0.0
    %576 = vmatpush2.msra.mxu0 0.0
    %577 = vmatprep.subr.mxu0 0.0
    %578 = vmatpush2.msra.mxu0 0.0
    %579 = vmatprep.subr.mxu0 0.0
    %580 = vmatpush2.msra.mxu0 0.0
    %581 = vmatprep.subr.mxu0 0.0
    %582 = vmatpush2.msra.mxu0 0.0
    %583 = vmatprep.subr.mxu0 0.0
    %584 = vmatpush2.msra.mxu0 0.0
    %585 = vmatprep.subr.mxu0 0.0
    %586 = vmatpush2.msra.mxu0 0.0
    %587 = vmatprep.subr.mxu0 0.0
    %588 = vmatpush2.msra.mxu0 0.0
    %589 = vmatprep.subr.mxu0 0.0
    %590 = vmatpush2.msra.mxu0 0.0
    %591 = vmatprep.subr.mxu0 0.0
    %592 = vmatpush2.msra.mxu0 0.0
    %593 = vmatprep.subr.mxu0 0.0
    %594 = vmatpush2.msra.mxu0 0.0
    %595 = vmatprep.subr.mxu0 0.0
    %596 = vmatpush2.msra.mxu0 0.0
    %597 = vmatprep.subr.mxu0 0.0
    %598 = vmatpush2.msra.mxu0 0.0
    %599 = vmatprep.subr.mxu0 0.0
    %600 = vmatpush2.msra.mxu0 0.0
    %601 = vmatprep.mubr.f32.mxu0 0.0
    %602 = vmatmul.mubr.f32.gmra.mxu0 %v532
    %v603 = vpop.f32.mrf.mxu0
    %v604 = vadd.f32 0.0, %v603
    %v605 = vpop.f32.mrf.mxu0
    %606 = vdwg.mxu0
    %v607 = vadd.f32 %v536, %v604
    %v608 = vtanh.pop %v607
    %v609 = vadd.f32 %v608, %v230
    %610 = vst [vmem:[%s535] sm:$0xff] %v609
    %s611 = scalar_lea.vmem [#allocation3], 40
    %v612 = vld [vmem:[%s611] sm:$0xff]
    %613 = vmatprep.subr.mxu0 0.0
    %614 = vmatpush1.msra.mxu0 %v229
    %615 = vmatprep.subr.mxu0 0.0
    %616 = vmatpush1.msra.mxu0 %v228
    %617 = vmatprep.subr.mxu0 0.0
    %618 = vmatpush1.msra.mxu0 %v227
    %619 = vmatprep.subr.mxu0 0.0
    %620 = vmatpush1.msra.mxu0 %v226
    %621 = vmatprep.subr.mxu0 0.0
    %622 = vmatpush1.msra.mxu0 %v225
    %623 = vmatprep.subr.mxu0 0.0
    %624 = vmatpush1.msra.mxu0 %v224
    %625 = vmatprep.subr.mxu0 0.0
    %626 = vmatpush1.msra.mxu0 %v223
    %627 = vmatprep.subr.mxu0 0.0
    %628 = vmatpush1.msra.mxu0 %v222
    %629 = vmatprep.subr.mxu0 0.0
    %630 = vmatpush1.msra.mxu0 %v221
    %631 = vmatprep.subr.mxu0 0.0
    %632 = vmatpush1.msra.mxu0 %v220
    %633 = vmatprep.subr.mxu0 0.0
    %634 = vmatpush1.msra.mxu0 %v219
    %635 = vmatprep.subr.mxu0 0.0
    %636 = vmatpush1.msra.mxu0 %v218
    %637 = vmatprep.subr.mxu0 0.0
    %638 = vmatpush1.msra.mxu0 %v217
    %639 = vmatprep.subr.mxu0 0.0
    %640 = vmatpush1.msra.mxu0 %v216
    %641 = vmatprep.subr.mxu0 0.0
    %642 = vmatpush1.msra.mxu0 %v215
    %643 = vmatprep.subr.mxu0 0.0
    %644 = vmatpush1.msra.mxu0 %v214
    %645 = vmatprep.subr.mxu0 0.0
    %646 = vmatpush2.msra.mxu0 0.0
    %647 = vmatprep.subr.mxu0 0.0
    %648 = vmatpush2.msra.mxu0 0.0
    %649 = vmatprep.subr.mxu0 0.0
    %650 = vmatpush2.msra.mxu0 0.0
    %651 = vmatprep.subr.mxu0 0.0
    %652 = vmatpush2.msra.mxu0 0.0
    %653 = vmatprep.subr.mxu0 0.0
    %654 = vmatpush2.msra.mxu0 0.0
    %655 = vmatprep.subr.mxu0 0.0
    %656 = vmatpush2.msra.mxu0 0.0
    %657 = vmatprep.subr.mxu0 0.0
    %658 = vmatpush2.msra.mxu0 0.0
    %659 = vmatprep.subr.mxu0 0.0
    %660 = vmatpush2.msra.mxu0 0.0
    %661 = vmatprep.subr.mxu0 0.0
    %662 = vmatpush2.msra.mxu0 0.0
    %663 = vmatprep.subr.mxu0 0.0
    %664 = vmatpush2.msra.mxu0 0.0
    %665 = vmatprep.subr.mxu0 0.0
    %666 = vmatpush2.msra.mxu0 0.0
    %667 = vmatprep.subr.mxu0 0.0
    %668 = vmatpush2.msra.mxu0 0.0
    %669 = vmatprep.subr.mxu0 0.0
    %670 = vmatpush2.msra.mxu0 0.0
    %671 = vmatprep.subr.mxu0 0.0
    %672 = vmatpush2.msra.mxu0 0.0
    %673 = vmatprep.subr.mxu0 0.0
    %674 = vmatpush2.msra.mxu0 0.0
    %675 = vmatprep.subr.mxu0 0.0
    %676 = vmatpush2.msra.mxu0 0.0
    %677 = vmatprep.mubr.f32.mxu0 0.0
    %678 = vmatmul.mubr.f32.gmra.mxu0 %v608
    %v679 = vpop.f32.mrf.mxu0
    %v680 = vadd.f32 0.0, %v679
    %v681 = vpop.f32.mrf.mxu0
    %682 = vdwg.mxu0
    %v683 = vadd.f32 %v612, %v680
    %v684 = vtanh.pop %v683
    %v685 = vadd.f32 %v684, %v230
    %686 = vst [vmem:[%s611] sm:$0xff] %v685
    %s687 = scalar_lea.vmem [#allocation3], 48
    %v688 = vld [vmem:[%s687] sm:$0xff]
    %689 = vmatprep.subr.mxu0 0.0
    %690 = vmatpush1.msra.mxu0 %v229
    %691 = vmatprep.subr.mxu0 0.0
    %692 = vmatpush1.msra.mxu0 %v228
    %693 = vmatprep.subr.mxu0 0.0
    %694 = vmatpush1.msra.mxu0 %v227
    %695 = vmatprep.subr.mxu0 0.0
    %696 = vmatpush1.msra.mxu0 %v226
    %697 = vmatprep.subr.mxu0 0.0
    %698 = vmatpush1.msra.mxu0 %v225
    %699 = vmatprep.subr.mxu0 0.0
    %700 = vmatpush1.msra.mxu0 %v224
    %701 = vmatprep.subr.mxu0 0.0
    %702 = vmatpush1.msra.mxu0 %v223
    %703 = vmatprep.subr.mxu0 0.0
    %704 = vmatpush1.msra.mxu0 %v222
    %705 = vmatprep.subr.mxu0 0.0
    %706 = vmatpush1.msra.mxu0 %v221
    %707 = vmatprep.subr.mxu0 0.0
    %708 = vmatpush1.msra.mxu0 %v220
    %709 = vmatprep.subr.mxu0 0.0
    %710 = vmatpush1.msra.mxu0 %v219
    %711 = vmatprep.subr.mxu0 0.0
    %712 = vmatpush1.msra.mxu0 %v218
    %713 = vmatprep.subr.mxu0 0.0
    %714 = vmatpush1.msra.mxu0 %v217
    %715 = vmatprep.subr.mxu0 0.0
    %716 = vmatpush1.msra.mxu0 %v216
    %717 = vmatprep.subr.mxu0 0.0
    %718 = vmatpush1.msra.mxu0 %v215
    %719 = vmatprep.subr.mxu0 0.0
    %720 = vmatpush1.msra.mxu0 %v214
    %721 = vmatprep.subr.mxu0 0.0
    %722 = vmatpush2.msra.mxu0 0.0
    %723 = vmatprep.subr.mxu0 0.0
    %724 = vmatpush2.msra.mxu0 0.0
    %725 = vmatprep.subr.mxu0 0.0
    %726 = vmatpush2.msra.mxu0 0.0
    %727 = vmatprep.subr.mxu0 0.0
    %728 = vmatpush2.msra.mxu0 0.0
    %729 = vmatprep.subr.mxu0 0.0
    %730 = vmatpush2.msra.mxu0 0.0
    %731 = vmatprep.subr.mxu0 0.0
    %732 = vmatpush2.msra.mxu0 0.0
    %733 = vmatprep.subr.mxu0 0.0
    %734 = vmatpush2.msra.mxu0 0.0
    %735 = vmatprep.subr.mxu0 0.0
    %736 = vmatpush2.msra.mxu0 0.0
    %737 = vmatprep.subr.mxu0 0.0
    %738 = vmatpush2.msra.mxu0 0.0
    %739 = vmatprep.subr.mxu0 0.0
    %740 = vmatpush2.msra.mxu0 0.0
    %741 = vmatprep.subr.mxu0 0.0
    %742 = vmatpush2.msra.mxu0 0.0
    %743 = vmatprep.subr.mxu0 0.0
    %744 = vmatpush2.msra.mxu0 0.0
    %745 = vmatprep.subr.mxu0 0.0
    %746 = vmatpush2.msra.mxu0 0.0
    %747 = vmatprep.subr.mxu0 0.0
    %748 = vmatpush2.msra.mxu0 0.0
    %749 = vmatprep.subr.mxu0 0.0
    %750 = vmatpush2.msra.mxu0 0.0
    %751 = vmatprep.subr.mxu0 0.0
    %752 = vmatpush2.msra.mxu0 0.0
    %753 = vmatprep.mubr.f32.mxu0 0.0
    %754 = vmatmul.mubr.f32.gmra.mxu0 %v684
    %v755 = vpop.f32.mrf.mxu0
    %v756 = vadd.f32 0.0, %v755
    %v757 = vpop.f32.mrf.mxu0
    %758 = vdwg.mxu0
    %v759 = vadd.f32 %v688, %v756
    %v760 = vtanh.pop %v759
    %v761 = vadd.f32 %v760, %v230
    %762 = vst [vmem:[%s687] sm:$0xff] %v761
    %s763 = scalar_lea.vmem [#allocation3], 56
    %v764 = vld [vmem:[%s763] sm:$0xff]
    %765 = vmatprep.subr.mxu0 0.0
    %766 = vmatpush1.msra.mxu0 %v229
    %767 = vmatprep.subr.mxu0 0.0
    %768 = vmatpush1.msra.mxu0 %v228
    %769 = vmatprep.subr.mxu0 0.0
    %770 = vmatpush1.msra.mxu0 %v227
    %771 = vmatprep.subr.mxu0 0.0
    %772 = vmatpush1.msra.mxu0 %v226
    %773 = vmatprep.subr.mxu0 0.0
    %774 = vmatpush1.msra.mxu0 %v225
    %775 = vmatprep.subr.mxu0 0.0
    %776 = vmatpush1.msra.mxu0 %v224
    %777 = vmatprep.subr.mxu0 0.0
    %778 = vmatpush1.msra.mxu0 %v223
    %779 = vmatprep.subr.mxu0 0.0
    %780 = vmatpush1.msra.mxu0 %v222
    %781 = vmatprep.subr.mxu0 0.0
    %782 = vmatpush1.msra.mxu0 %v221
    %783 = vmatprep.subr.mxu0 0.0
    %784 = vmatpush1.msra.mxu0 %v220
    %785 = vmatprep.subr.mxu0 0.0
    %786 = vmatpush1.msra.mxu0 %v219
    %787 = vmatprep.subr.mxu0 0.0
    %788 = vmatpush1.msra.mxu0 %v218
    %789 = vmatprep.subr.mxu0 0.0
    %790 = vmatpush1.msra.mxu0 %v217
    %791 = vmatprep.subr.mxu0 0.0
    %792 = vmatpush1.msra.mxu0 %v216
    %793 = vmatprep.subr.mxu0 0.0
    %794 = vmatpush1.msra.mxu0 %v215
    %795 = vmatprep.subr.mxu0 0.0
    %796 = vmatpush1.msra.mxu0 %v214
    %797 = vmatprep.subr.mxu0 0.0
    %798 = vmatpush2.msra.mxu0 0.0
    %799 = vmatprep.subr.mxu0 0.0
    %800 = vmatpush2.msra.mxu0 0.0
    %801 = vmatprep.subr.mxu0 0.0
    %802 = vmatpush2.msra.mxu0 0.0
    %803 = vmatprep.subr.mxu0 0.0
    %804 = vmatpush2.msra.mxu0 0.0
    %805 = vmatprep.subr.mxu0 0.0
    %806 = vmatpush2.msra.mxu0 0.0
    %807 = vmatprep.subr.mxu0 0.0
    %808 = vmatpush2.msra.mxu0 0.0
    %809 = vmatprep.subr.mxu0 0.0
    %810 = vmatpush2.msra.mxu0 0.0
    %811 = vmatprep.subr.mxu0 0.0
    %812 = vmatpush2.msra.mxu0 0.0
    %813 = vmatprep.subr.mxu0 0.0
    %814 = vmatpush2.msra.mxu0 0.0
    %815 = vmatprep.subr.mxu0 0.0
    %816 = vmatpush2.msra.mxu0 0.0
    %817 = vmatprep.subr.mxu0 0.0
    %818 = vmatpush2.msra.mxu0 0.0
    %819 = vmatprep.subr.mxu0 0.0
    %820 = vmatpush2.msra.mxu0 0.0
    %821 = vmatprep.subr.mxu0 0.0
    %822 = vmatpush2.msra.mxu0 0.0
    %823 = vmatprep.subr.mxu0 0.0
    %824 = vmatpush2.msra.mxu0 0.0
    %825 = vmatprep.subr.mxu0 0.0
    %826 = vmatpush2.msra.mxu0 0.0
    %827 = vmatprep.subr.mxu0 0.0
    %828 = vmatpush2.msra.mxu0 0.0
    %829 = vmatprep.mubr.f32.mxu0 0.0
    %830 = vmatmul.mubr.f32.gmra.mxu0 %v760
    %v831 = vpop.f32.mrf.mxu0
    %v832 = vadd.f32 0.0, %v831
    %v833 = vpop.f32.mrf.mxu0
    %834 = vdwg.mxu0
    %v835 = vadd.f32 %v764, %v832
    %v836 = vtanh.pop %v835
    %v837 = vadd.f32 %v836, %v230
    %838 = vst [vmem:[%s763] sm:$0xff] %v837
    %839 = vst [vmem:[#allocation2] sm:$0xff] %v836
    %v840 = vld [vmem:[#allocation3] sm:$0xff]
    %v841 = vld [vmem:[#allocation3 + $0x8] sm:$0xff]
    %v842 = vld [vmem:[#allocation3 + $0x10] sm:$0xff]
    %v843 = vld [vmem:[#allocation3 + $0x18] sm:$0xff]
    %v844 = vld [vmem:[#allocation3 + $0x20] sm:$0xff]
    %v845 = vld [vmem:[#allocation3 + $0x28] sm:$0xff]
    %v846 = vld [vmem:[#allocation3 + $0x30] sm:$0xff]
    %v847 = vld [vmem:[#allocation3 + $0x38] sm:$0xff]
    %v848 = vld [vmem:[#allocation5] sm:$0xff]
    %v849 = vld [vmem:[#allocation5 + $0x8] sm:$0xff]
    %v850 = vld [vmem:[#allocation5 + $0x10] sm:$0xff]
    %v851 = vld [vmem:[#allocation5 + $0x18] sm:$0xff]
    %v852 = vld [vmem:[#allocation5 + $0x20] sm:$0xff]
    %v853 = vld [vmem:[#allocation5 + $0x28] sm:$0xff]
    %v854 = vld [vmem:[#allocation5 + $0x30] sm:$0xff]
    %v855 = vld [vmem:[#allocation5 + $0x38] sm:$0xff]
    %v856 = vld [vmem:[#allocation5 + $0x40] sm:$0xff]
    %v857 = vld [vmem:[#allocation5 + $0x48] sm:$0xff]
    %v858 = vld [vmem:[#allocation5 + $0x50] sm:$0xff]
    %v859 = vld [vmem:[#allocation5 + $0x58] sm:$0xff]
    %v860 = vld [vmem:[#allocation5 + $0x60] sm:$0xff]
    %v861 = vld [vmem:[#allocation5 + $0x68] sm:$0xff]
    %v862 = vld [vmem:[#allocation5 + $0x70] sm:$0xff]
    %v863 = vld [vmem:[#allocation5 + $0x78] sm:$0xff]
    %864 = vxpose.xlu0.b32.start [1/16] %v840, 128
    %865 = vxpose.xlu0.b32.cont [2/16] %v841, 128
    %866 = vxpose.xlu0.b32.cont [3/16] %v842, 128
    %867 = vxpose.xlu0.b32.cont [4/16] %v843, 128
    %868 = vxpose.xlu0.b32.cont [5/16] %v844, 128
    %869 = vxpose.xlu0.b32.cont [6/16] %v845, 128
    %870 = vxpose.xlu0.b32.cont [7/16] %v846, 128
    %871 = vxpose.xlu0.b32.cont [8/16] %v847, 128
    %872 = vxpose.xlu0.b32.cont [9/16] 0.0, 128
    %873 = vxpose.xlu0.b32.cont [10/16] 0.0, 128
    %874 = vxpose.xlu0.b32.cont [11/16] 0.0, 128
    %875 = vxpose.xlu0.b32.cont [12/16] 0.0, 128
    %876 = vxpose.xlu0.b32.cont [13/16] 0.0, 128
    %877 = vxpose.xlu0.b32.cont [14/16] 0.0, 128
    %878 = vxpose.xlu0.b32.cont [15/16] 0.0, 128
    %879 = vxpose.xlu0.b32.end [16/16] 0.0, 128
    %v880 = vpop.trf.xlu0
    %v881 = vpop.trf.xlu0
    %v882 = vpop.trf.xlu0
    %v883 = vpop.trf.xlu0
    %v884 = vpop.trf.xlu0
    %v885 = vpop.trf.xlu0
    %v886 = vpop.trf.xlu0
    %v887 = vpop.trf.xlu0
    %v888 = vpop.trf.xlu0
    %v889 = vpop.trf.xlu0
    %v890 = vpop.trf.xlu0
    %v891 = vpop.trf.xlu0
    %v892 = vpop.trf.xlu0
    %v893 = vpop.trf.xlu0
    %v894 = vpop.trf.xlu0
    %v895 = vpop.trf.xlu0
    %vm896 = vcmask 523264
    %v898 = vsel %vm896, %v880, 0
    %v901 = vsel %vm896, %v881, 0
    %v904 = vsel %vm896, %v882, 0
    %v907 = vsel %vm896, %v883, 0
    %v910 = vsel %vm896, %v884, 0
    %v913 = vsel %vm896, %v885, 0
    %v916 = vsel %vm896, %v886, 0
    %v919 = vsel %vm896, %v887, 0
    %v922 = vsel %vm896, %v888, 0
    %v925 = vsel %vm896, %v889, 0
    %v928 = vsel %vm896, %v890, 0
    %v931 = vsel %vm896, %v891, 0
    %v934 = vsel %vm896, %v892, 0
    %v937 = vsel %vm896, %v893, 0
    %v940 = vsel %vm896, %v894, 0
    %v943 = vsel %vm896, %v895, 0
    %945 = vmatprep.subr.mxu0 0.0
    %946 = vmatpush1.msra.mxu0 0.0
    %947 = vmatprep.subr.mxu0 0.0
    %948 = vmatpush1.msra.mxu0 0.0
    %949 = vmatprep.subr.mxu0 0.0
    %950 = vmatpush1.msra.mxu0 0.0
    %951 = vmatprep.subr.mxu0 0.0
    %952 = vmatpush1.msra.mxu0 0.0
    %953 = vmatprep.subr.mxu0 0.0
    %954 = vmatpush1.msra.mxu0 0.0
    %955 = vmatprep.subr.mxu0 0.0
    %956 = vmatpush1.msra.mxu0 0.0
    %957 = vmatprep.subr.mxu0 0.0
    %958 = vmatpush1.msra.mxu0 0.0
    %959 = vmatprep.subr.mxu0 0.0
    %960 = vmatpush1.msra.mxu0 0.0
    %961 = vmatprep.subr.mxu0 0.0
    %962 = vmatpush1.msra.mxu0 %v847
    %963 = vmatprep.subr.mxu0 0.0
    %964 = vmatpush1.msra.mxu0 %v846
    %965 = vmatprep.subr.mxu0 0.0
    %966 = vmatpush1.msra.mxu0 %v845
    %967 = vmatprep.subr.mxu0 0.0
    %968 = vmatpush1.msra.mxu0 %v844
    %969 = vmatprep.subr.mxu0 0.0
    %970 = vmatpush1.msra.mxu0 %v843
    %971 = vmatprep.subr.mxu0 0.0
    %972 = vmatpush1.msra.mxu0 %v842
    %973 = vmatprep.subr.mxu0 0.0
    %974 = vmatpush1.msra.mxu0 %v841
    %975 = vmatprep.subr.mxu0 0.0
    %976 = vmatpush1.msra.mxu0 %v840
    %977 = vmatprep.subr.mxu0 0.0
    %978 = vmatpush2.msra.mxu0 0.0
    %979 = vmatprep.subr.mxu0 0.0
    %980 = vmatpush2.msra.mxu0 0.0
    %981 = vmatprep.subr.mxu0 0.0
    %982 = vmatpush2.msra.mxu0 0.0
    %983 = vmatprep.subr.mxu0 0.0
    %984 = vmatpush2.msra.mxu0 0.0
    %985 = vmatprep.subr.mxu0 0.0
    %986 = vmatpush2.msra.mxu0 0.0
    %987 = vmatprep.subr.mxu0 0.0
    %988 = vmatpush2.msra.mxu0 0.0
    %989 = vmatprep.subr.mxu0 0.0
    %990 = vmatpush2.msra.mxu0 0.0
    %991 = vmatprep.subr.mxu0 0.0
    %992 = vmatpush2.msra.mxu0 0.0
    %993 = vmatprep.subr.mxu0 0.0
    %994 = vmatpush2.msra.mxu0 0.0
    %995 = vmatprep.subr.mxu0 0.0
    %996 = vmatpush2.msra.mxu0 0.0
    %997 = vmatprep.subr.mxu0 0.0
    %998 = vmatpush2.msra.mxu0 0.0
    %999 = vmatprep.subr.mxu0 0.0
    %1000 = vmatpush2.msra.mxu0 0.0
    %1001 = vmatprep.subr.mxu0 0.0
    %1002 = vmatpush2.msra.mxu0 0.0
    %1003 = vmatprep.subr.mxu0 0.0
    %1004 = vmatpush2.msra.mxu0 0.0
    %1005 = vmatprep.subr.mxu0 0.0
    %1006 = vmatpush2.msra.mxu0 0.0
    %1007 = vmatprep.subr.mxu0 0.0
    %1008 = vmatpush2.msra.mxu0 0.0
    %1009 = vmatprep.mubr.f32.mxu0 0.0
    %1010 = vmatmul.mubr.f32.gmra.mxu0 %v898
    %v1011 = vpop.f32.mrf.mxu0
    %v1012 = vadd.f32 0.0, %v1011
    %v1013 = vpop.f32.mrf.mxu0
    %1014 = vmatprep.mubr.f32.mxu0 0.0
    %1015 = vmatmul.mubr.f32.gmra.mxu0 %v901
    %v1016 = vpop.f32.mrf.mxu0
    %v1017 = vadd.f32 0.0, %v1016
    %v1018 = vpop.f32.mrf.mxu0
    %1019 = vmatprep.mubr.f32.mxu0 0.0
    %1020 = vmatmul.mubr.f32.gmra.mxu0 %v904
    %v1021 = vpop.f32.mrf.mxu0
    %v1022 = vadd.f32 0.0, %v1021
    %v1023 = vpop.f32.mrf.mxu0
    %1024 = vmatprep.mubr.f32.mxu0 0.0
    %1025 = vmatmul.mubr.f32.gmra.mxu0 %v907
    %v1026 = vpop.f32.mrf.mxu0
    %v1027 = vadd.f32 0.0, %v1026
    %v1028 = vpop.f32.mrf.mxu0
    %1029 = vmatprep.mubr.f32.mxu0 0.0
    %1030 = vmatmul.mubr.f32.gmra.mxu0 %v910
    %v1031 = vpop.f32.mrf.mxu0
    %v1032 = vadd.f32 0.0, %v1031
    %v1033 = vpop.f32.mrf.mxu0
    %1034 = vmatprep.mubr.f32.mxu0 0.0
    %1035 = vmatmul.mubr.f32.gmra.mxu0 %v913
    %v1036 = vpop.f32.mrf.mxu0
    %v1037 = vadd.f32 0.0, %v1036
    %v1038 = vpop.f32.mrf.mxu0
    %1039 = vmatprep.mubr.f32.mxu0 0.0
    %1040 = vmatmul.mubr.f32.gmra.mxu0 %v916
    %v1041 = vpop.f32.mrf.mxu0
    %v1042 = vadd.f32 0.0, %v1041
    %v1043 = vpop.f32.mrf.mxu0
    %1044 = vmatprep.mubr.f32.mxu0 0.0
    %1045 = vmatmul.mubr.f32.gmra.mxu0 %v919
    %v1046 = vpop.f32.mrf.mxu0
    %v1047 = vadd.f32 0.0, %v1046
    %v1048 = vpop.f32.mrf.mxu0
    %1049 = vmatprep.mubr.f32.mxu0 0.0
    %1050 = vmatmul.mubr.f32.gmra.mxu0 %v922
    %v1051 = vpop.f32.mrf.mxu0
    %v1052 = vadd.f32 0.0, %v1051
    %v1053 = vpop.f32.mrf.mxu0
    %1054 = vmatprep.mubr.f32.mxu0 0.0
    %1055 = vmatmul.mubr.f32.gmra.mxu0 %v925
    %v1056 = vpop.f32.mrf.mxu0
    %v1057 = vadd.f32 0.0, %v1056
    %v1058 = vpop.f32.mrf.mxu0
    %1059 = vmatprep.mubr.f32.mxu0 0.0
    %1060 = vmatmul.mubr.f32.gmra.mxu0 %v928
    %v1061 = vpop.f32.mrf.mxu0
    %v1062 = vadd.f32 0.0, %v1061
    %v1063 = vpop.f32.mrf.mxu0
    %1064 = vmatprep.mubr.f32.mxu0 0.0
    %1065 = vmatmul.mubr.f32.gmra.mxu0 %v931
    %v1066 = vpop.f32.mrf.mxu0
    %v1067 = vadd.f32 0.0, %v1066
    %v1068 = vpop.f32.mrf.mxu0
    %1069 = vmatprep.mubr.f32.mxu0 0.0
    %1070 = vmatmul.mubr.f32.gmra.mxu0 %v934
    %v1071 = vpop.f32.mrf.mxu0
    %v1072 = vadd.f32 0.0, %v1071
    %v1073 = vpop.f32.mrf.mxu0
    %1074 = vmatprep.mubr.f32.mxu0 0.0
    %1075 = vmatmul.mubr.f32.gmra.mxu0 %v937
    %v1076 = vpop.f32.mrf.mxu0
    %v1077 = vadd.f32 0.0, %v1076
    %v1078 = vpop.f32.mrf.mxu0
    %1079 = vmatprep.mubr.f32.mxu0 0.0
    %1080 = vmatmul.mubr.f32.gmra.mxu0 %v940
    %v1081 = vpop.f32.mrf.mxu0
    %v1082 = vadd.f32 0.0, %v1081
    %v1083 = vpop.f32.mrf.mxu0
    %1084 = vmatprep.mubr.f32.mxu0 0.0
    %1085 = vmatmul.mubr.f32.gmra.mxu0 %v943
    %v1086 = vpop.f32.mrf.mxu0
    %v1087 = vadd.f32 0.0, %v1086
    %v1088 = vpop.f32.mrf.mxu0
    %1089 = vdwg.mxu0
    %v1090 = vadd.f32 %v848, %v1012
    %v1091 = vadd.f32 %v849, %v1017
    %v1092 = vadd.f32 %v850, %v1022
    %v1093 = vadd.f32 %v851, %v1027
    %v1094 = vadd.f32 %v852, %v1032
    %v1095 = vadd.f32 %v853, %v1037
    %v1096 = vadd.f32 %v854, %v1042
    %v1097 = vadd.f32 %v855, %v1047
    %v1098 = vadd.f32 %v856, %v1052
    %v1099 = vadd.f32 %v857, %v1057
    %v1100 = vadd.f32 %v858, %v1062
    %v1101 = vadd.f32 %v859, %v1067
    %v1102 = vadd.f32 %v860, %v1072
    %v1103 = vadd.f32 %v861, %v1077
    %v1104 = vadd.f32 %v862, %v1082
    %v1105 = vadd.f32 %v863, %v1087
    %1106 = vst [vmem:[#allocation5] sm:$0xff] %v1090
    %1107 = vst [vmem:[#allocation5 + $0x8] sm:$0xff] %v1091
    %1108 = vst [vmem:[#allocation5 + $0x10] sm:$0xff] %v1092
    %1109 = vst [vmem:[#allocation5 + $0x18] sm:$0xff] %v1093
    %1110 = vst [vmem:[#allocation5 + $0x20] sm:$0xff] %v1094
    %1111 = vst [vmem:[#allocation5 + $0x28] sm:$0xff] %v1095
    %1112 = vst [vmem:[#allocation5 + $0x30] sm:$0xff] %v1096
    %1113 = vst [vmem:[#allocation5 + $0x38] sm:$0xff] %v1097
    %1114 = vst [vmem:[#allocation5 + $0x40] sm:$0xff] %v1098
    %1115 = vst [vmem:[#allocation5 + $0x48] sm:$0xff] %v1099
    %1116 = vst [vmem:[#allocation5 + $0x50] sm:$0xff] %v1100
    %1117 = vst [vmem:[#allocation5 + $0x58] sm:$0xff] %v1101
    %1118 = vst [vmem:[#allocation5 + $0x60] sm:$0xff] %v1102
    %1119 = vst [vmem:[#allocation5 + $0x68] sm:$0xff] %v1103
    %1120 = vst [vmem:[#allocation5 + $0x70] sm:$0xff] %v1104
    %1121 = vst [vmem:[#allocation5 + $0x78] sm:$0xff] %v1105
    %v1122 = vld [vmem:[%s7] sm:$0xff]
    %v1123 = vld [vmem:[%s7 + $0x8] sm:$0xff]
    %v1124 = vld [vmem:[%s7 + $0x10] sm:$0xff]
    %v1125 = vld [vmem:[%s7 + $0x18] sm:$0xff]
    %v1126 = vld [vmem:[%s7 + $0x20] sm:$0xff]
    %v1127 = vld [vmem:[%s7 + $0x28] sm:$0xff]
    %v1128 = vld [vmem:[%s7 + $0x30] sm:$0xff]
    %v1129 = vld [vmem:[%s7 + $0x38] sm:$0xff]
    %v1130 = vld [vmem:[%s7 + $0x40] sm:$0xff]
    %v1131 = vld [vmem:[%s7 + $0x48] sm:$0xff]
    %v1132 = vld [vmem:[%s7 + $0x50] sm:$0xff]
    %v1133 = vld [vmem:[%s7 + $0x58] sm:$0xff]
    %v1134 = vld [vmem:[%s7 + $0x60] sm:$0xff]
    %v1135 = vld [vmem:[%s7 + $0x68] sm:$0xff]
    %v1136 = vld [vmem:[%s7 + $0x70] sm:$0xff]
    %v1137 = vld [vmem:[%s7 + $0x78] sm:$0xff]
    %v1138 = vld [vmem:[%s1] sm:$0xff]
    %v1139 = vld [vmem:[%s1 + $0x8] sm:$0xff]
    %v1140 = vld [vmem:[%s1 + $0x10] sm:$0xff]
    %v1141 = vld [vmem:[%s1 + $0x18] sm:$0xff]
    %v1142 = vld [vmem:[%s1 + $0x20] sm:$0xff]
    %v1143 = vld [vmem:[%s1 + $0x28] sm:$0xff]
    %v1144 = vld [vmem:[%s1 + $0x30] sm:$0xff]
    %v1145 = vld [vmem:[%s1 + $0x38] sm:$0xff]
    %1146 = vmatprep.subr.mxu0 0.0
    %1147 = vmatpush1.msra.mxu0 0.0
    %1148 = vmatprep.subr.mxu0 0.0
    %1149 = vmatpush1.msra.mxu0 0.0
    %1150 = vmatprep.subr.mxu0 0.0
    %1151 = vmatpush1.msra.mxu0 0.0
    %1152 = vmatprep.subr.mxu0 0.0
    %1153 = vmatpush1.msra.mxu0 0.0
    %1154 = vmatprep.subr.mxu0 0.0
    %1155 = vmatpush1.msra.mxu0 0.0
    %1156 = vmatprep.subr.mxu0 0.0
    %1157 = vmatpush1.msra.mxu0 0.0
    %1158 = vmatprep.subr.mxu0 0.0
    %1159 = vmatpush1.msra.mxu0 0.0
    %1160 = vmatprep.subr.mxu0 0.0
    %1161 = vmatpush1.msra.mxu0 0.0
    %1162 = vmatprep.subr.mxu0 0.0
    %1163 = vmatpush1.msra.mxu0 %v1145
    %1164 = vmatprep.subr.mxu0 0.0
    %1165 = vmatpush1.msra.mxu0 %v1144
    %1166 = vmatprep.subr.mxu0 0.0
    %1167 = vmatpush1.msra.mxu0 %v1143
    %1168 = vmatprep.subr.mxu0 0.0
    %1169 = vmatpush1.msra.mxu0 %v1142
    %1170 = vmatprep.subr.mxu0 0.0
    %1171 = vmatpush1.msra.mxu0 %v1141
    %1172 = vmatprep.subr.mxu0 0.0
    %1173 = vmatpush1.msra.mxu0 %v1140
    %1174 = vmatprep.subr.mxu0 0.0
    %1175 = vmatpush1.msra.mxu0 %v1139
    %1176 = vmatprep.subr.mxu0 0.0
    %1177 = vmatpush1.msra.mxu0 %v1138
    %1178 = vmatprep.subr.mxu0 0.0
    %1179 = vmatpush2.msra.mxu0 0.0
    %1180 = vmatprep.subr.mxu0 0.0
    %1181 = vmatpush2.msra.mxu0 0.0
    %1182 = vmatprep.subr.mxu0 0.0
    %1183 = vmatpush2.msra.mxu0 0.0
    %1184 = vmatprep.subr.mxu0 0.0
    %1185 = vmatpush2.msra.mxu0 0.0
    %1186 = vmatprep.subr.mxu0 0.0
    %1187 = vmatpush2.msra.mxu0 0.0
    %1188 = vmatprep.subr.mxu0 0.0
    %1189 = vmatpush2.msra.mxu0 0.0
    %1190 = vmatprep.subr.mxu0 0.0
    %1191 = vmatpush2.msra.mxu0 0.0
    %1192 = vmatprep.subr.mxu0 0.0
    %1193 = vmatpush2.msra.mxu0 0.0
    %1194 = vmatprep.subr.mxu0 0.0
    %1195 = vmatpush2.msra.mxu0 0.0
    %1196 = vmatprep.subr.mxu0 0.0
    %1197 = vmatpush2.msra.mxu0 0.0
    %1198 = vmatprep.subr.mxu0 0.0
    %1199 = vmatpush2.msra.mxu0 0.0
    %1200 = vmatprep.subr.mxu0 0.0
    %1201 = vmatpush2.msra.mxu0 0.0
    %1202 = vmatprep.subr.mxu0 0.0
    %1203 = vmatpush2.msra.mxu0 0.0
    %1204 = vmatprep.subr.mxu0 0.0
    %1205 = vmatpush2.msra.mxu0 0.0
    %1206 = vmatprep.subr.mxu0 0.0
    %1207 = vmatpush2.msra.mxu0 0.0
    %1208 = vmatprep.subr.mxu0 0.0
    %1209 = vmatpush2.msra.mxu0 0.0
    %1210 = vmatprep.mubr.f32.mxu0 0.0
    %1211 = vmatmul.mubr.f32.gmra.mxu0 %v898
    %v1212 = vpop.f32.mrf.mxu0
    %v1213 = vadd.f32 0.0, %v1212
    %v1214 = vpop.f32.mrf.mxu0
    %1215 = vmatprep.mubr.f32.mxu0 0.0
    %1216 = vmatmul.mubr.f32.gmra.mxu0 %v901
    %v1217 = vpop.f32.mrf.mxu0
    %v1218 = vadd.f32 0.0, %v1217
    %v1219 = vpop.f32.mrf.mxu0
    %1220 = vmatprep.mubr.f32.mxu0 0.0
    %1221 = vmatmul.mubr.f32.gmra.mxu0 %v904
    %v1222 = vpop.f32.mrf.mxu0
    %v1223 = vadd.f32 0.0, %v1222
    %v1224 = vpop.f32.mrf.mxu0
    %1225 = vmatprep.mubr.f32.mxu0 0.0
    %1226 = vmatmul.mubr.f32.gmra.mxu0 %v907
    %v1227 = vpop.f32.mrf.mxu0
    %v1228 = vadd.f32 0.0, %v1227
    %v1229 = vpop.f32.mrf.mxu0
    %1230 = vmatprep.mubr.f32.mxu0 0.0
    %1231 = vmatmul.mubr.f32.gmra.mxu0 %v910
    %v1232 = vpop.f32.mrf.mxu0
    %v1233 = vadd.f32 0.0, %v1232
    %v1234 = vpop.f32.mrf.mxu0
    %1235 = vmatprep.mubr.f32.mxu0 0.0
    %1236 = vmatmul.mubr.f32.gmra.mxu0 %v913
    %v1237 = vpop.f32.mrf.mxu0
    %v1238 = vadd.f32 0.0, %v1237
    %v1239 = vpop.f32.mrf.mxu0
    %1240 = vmatprep.mubr.f32.mxu0 0.0
    %1241 = vmatmul.mubr.f32.gmra.mxu0 %v916
    %v1242 = vpop.f32.mrf.mxu0
    %v1243 = vadd.f32 0.0, %v1242
    %v1244 = vpop.f32.mrf.mxu0
    %1245 = vmatprep.mubr.f32.mxu0 0.0
    %1246 = vmatmul.mubr.f32.gmra.mxu0 %v919
    %v1247 = vpop.f32.mrf.mxu0
    %v1248 = vadd.f32 0.0, %v1247
    %v1249 = vpop.f32.mrf.mxu0
    %1250 = vmatprep.mubr.f32.mxu0 0.0
    %1251 = vmatmul.mubr.f32.gmra.mxu0 %v922
    %v1252 = vpop.f32.mrf.mxu0
    %v1253 = vadd.f32 0.0, %v1252
    %v1254 = vpop.f32.mrf.mxu0
    %1255 = vmatprep.mubr.f32.mxu0 0.0
    %1256 = vmatmul.mubr.f32.gmra.mxu0 %v925
    %v1257 = vpop.f32.mrf.mxu0
    %v1258 = vadd.f32 0.0, %v1257
    %v1259 = vpop.f32.mrf.mxu0
    %1260 = vmatprep.mubr.f32.mxu0 0.0
    %1261 = vmatmul.mubr.f32.gmra.mxu0 %v928
    %v1262 = vpop.f32.mrf.mxu0
    %v1263 = vadd.f32 0.0, %v1262
    %v1264 = vpop.f32.mrf.mxu0
    %1265 = vmatprep.mubr.f32.mxu0 0.0
    %1266 = vmatmul.mubr.f32.gmra.mxu0 %v931
    %v1267 = vpop.f32.mrf.mxu0
    %v1268 = vadd.f32 0.0, %v1267
    %v1269 = vpop.f32.mrf.mxu0
    %1270 = vmatprep.mubr.f32.mxu0 0.0
    %1271 = vmatmul.mubr.f32.gmra.mxu0 %v934
    %v1272 = vpop.f32.mrf.mxu0
    %v1273 = vadd.f32 0.0, %v1272
    %v1274 = vpop.f32.mrf.mxu0
    %1275 = vmatprep.mubr.f32.mxu0 0.0
    %1276 = vmatmul.mubr.f32.gmra.mxu0 %v937
    %v1277 = vpop.f32.mrf.mxu0
    %v1278 = vadd.f32 0.0, %v1277
    %v1279 = vpop.f32.mrf.mxu0
    %1280 = vmatprep.mubr.f32.mxu0 0.0
    %1281 = vmatmul.mubr.f32.gmra.mxu0 %v940
    %v1282 = vpop.f32.mrf.mxu0
    %v1283 = vadd.f32 0.0, %v1282
    %v1284 = vpop.f32.mrf.mxu0
    %1285 = vmatprep.mubr.f32.mxu0 0.0
    %1286 = vmatmul.mubr.f32.gmra.mxu0 %v943
    %v1287 = vpop.f32.mrf.mxu0
    %v1288 = vadd.f32 0.0, %v1287
    %v1289 = vpop.f32.mrf.mxu0
    %1290 = vdwg.mxu0
    %v1291 = vadd.f32 %v1122, %v1213
    %v1292 = vadd.f32 %v1123, %v1218
    %v1293 = vadd.f32 %v1124, %v1223
    %v1294 = vadd.f32 %v1125, %v1228
    %v1295 = vadd.f32 %v1126, %v1233
    %v1296 = vadd.f32 %v1127, %v1238
    %v1297 = vadd.f32 %v1128, %v1243
    %v1298 = vadd.f32 %v1129, %v1248
    %v1299 = vadd.f32 %v1130, %v1253
    %v1300 = vadd.f32 %v1131, %v1258
    %v1301 = vadd.f32 %v1132, %v1263
    %v1302 = vadd.f32 %v1133, %v1268
    %v1303 = vadd.f32 %v1134, %v1273
    %v1304 = vadd.f32 %v1135, %v1278
    %v1305 = vadd.f32 %v1136, %v1283
    %v1306 = vadd.f32 %v1137, %v1288
    %vm1307 = vcmask 23552
    %1308 = vst.msk [vmem:[%s7] sm:$0xff] %vm1307, %v1291
    %1309 = vst.msk [vmem:[%s7 + $0x8] sm:$0xff] %vm1307, %v1292
    %1310 = vst.msk [vmem:[%s7 + $0x10] sm:$0xff] %vm1307, %v1293
    %1311 = vst.msk [vmem:[%s7 + $0x18] sm:$0xff] %vm1307, %v1294
    %1312 = vst.msk [vmem:[%s7 + $0x20] sm:$0xff] %vm1307, %v1295
    %1313 = vst.msk [vmem:[%s7 + $0x28] sm:$0xff] %vm1307, %v1296
    %1314 = vst.msk [vmem:[%s7 + $0x30] sm:$0xff] %vm1307, %v1297
    %1315 = vst.msk [vmem:[%s7 + $0x38] sm:$0xff] %vm1307, %v1298
    %1316 = vst.msk [vmem:[%s7 + $0x40] sm:$0xff] %vm1307, %v1299
    %1317 = vst.msk [vmem:[%s7 + $0x48] sm:$0xff] %vm1307, %v1300
    %1318 = vst.msk [vmem:[%s7 + $0x50] sm:$0xff] %vm1307, %v1301
    %1319 = vst.msk [vmem:[%s7 + $0x58] sm:$0xff] %vm1307, %v1302
    %1320 = vst.msk [vmem:[%s7 + $0x60] sm:$0xff] %vm1307, %v1303
    %1321 = vst.msk [vmem:[%s7 + $0x68] sm:$0xff] %vm1307, %v1304
    %1322 = vst.msk [vmem:[%s7 + $0x70] sm:$0xff] %vm1307, %v1305
    %1323 = vst.msk [vmem:[%s7 + $0x78] sm:$0xff] %vm1307, %v1306
    // Predicated region
    $region26: #{tpu_custom_call.1} parent=1 // pred_check
      _
    $region27: #{tpu_custom_call.1} parent=1 // pred_check_branch
      %1325 = sbr.rel (0) target = $region29
    $region28: #{tpu_custom_call.1} parent=1 // pred_region
      %s1327 = ssub.s32 1024, 1024
      %1328 = vsyncadd [#allocation4], %s1327
      %s1329 = sshll.u32 [#allocation3], 4
      %s1330 = int_to_ptr.vmem [resolvable:$true] %s1329
      %1335 = dma.vmem_to_hbm [thread:$0]  %s1330, 1024, %s5, [#allocation4], 128, 128, 8
    $region29: #{tpu_custom_call.1} parent=1 // pred_fallthru
      _
    // Predicated region
    $region30: #{tpu_custom_call.1} parent=1 // pred_check
      _
    $region31: #{tpu_custom_call.1} parent=1 // pred_check_branch
      %1337 = sbr.rel (0) target = $region33
    $region32: #{tpu_custom_call.1} parent=1 // pred_region
      %s1339 = ssub.s32 2048, 2048
      %1340 = vsyncadd [#allocation6], %s1339
      %s1341 = sshll.u32 [#allocation5], 4
      %s1342 = int_to_ptr.vmem [resolvable:$true] %s1341
      %1347 = dma.vmem_to_hbm [thread:$0]  %s1342, 2048, %s6, [#allocation6], 128, 128, 8
    $region33: #{tpu_custom_call.1} parent=1 // pred_fallthru
      _
    // Predicated region
    $region34: #{tpu_custom_call.1} parent=1 // pred_check
      _
    $region35: #{tpu_custom_call.1} parent=1 // pred_check_branch
      %1349 = sbr.rel (0) target = $region37
    $region36: #{tpu_custom_call.1} parent=1 // pred_region
      _
    $region37: #{tpu_custom_call.1} parent=1 // pred_fallthru
      _
    // Predicated region
    $region38: #{tpu_custom_call.1} parent=1 // pred_check
      _
    $region39: #{tpu_custom_call.1} parent=1 // pred_check_branch
      %1351 = sbr.rel (0) target = $region41
    $region40: #{tpu_custom_call.1} parent=1 // pred_region
      %1352 = dma.done [#allocation4], 1024
    $region41: #{tpu_custom_call.1} parent=1 // pred_fallthru
      _
    // Predicated region
    $region42: #{tpu_custom_call.1} parent=1 // pred_check
      _
    $region43: #{tpu_custom_call.1} parent=1 // pred_check_branch
      %1354 = sbr.rel (0) target = $region45
    $region44: #{tpu_custom_call.1} parent=1 // pred_region
      %1355 = dma.done [#allocation6], 2048
    $region45: #{tpu_custom_call.1} parent=1 // pred_fallthru
      _
    // Predicated region
    $region46: #{tpu_custom_call.1} parent=1 // pred_check
      _
    $region47: #{tpu_custom_call.1} parent=1 // pred_check_branch
      %1357 = sbr.rel (0) target = $region49
    $region48: #{tpu_custom_call.1} parent=1 // pred_region
      _
    $region49: #{tpu_custom_call.1} parent=1 // pred_fallthru
      _
    %1358 = vsyncpa [#allocation4], 1
    %1359 = vsyncpa [#allocation6], 1

</llo_original>
